<compile_context>
chip_gen: v7x
topology: tpu7x:2x2x1
jax: 0.10.0
libtpu: 0.0.40
codegen_flags: <defaults>
</compile_context>

<pallas_src>
import functools

import jax
import jax.numpy as jnp
from jax.experimental import pallas as pl
from jax.experimental.pallas import tpu as pltpu


def _round_up(n, m):
    return (n + m - 1) // m * m


def _vmem_capacity_bytes():
    try:
        cap = int(pltpu.get_tpu_info().vmem_capacity_bytes)
    except Exception:
        cap = 0
    if cap <= 0:
        cap = 64 << 20  # conservative default (v7x per-core VMEM)
    return max(cap, 32 << 20)


def _compiler_params():
    # Raise the scoped-VMEM limit (defaults: 16/32/32 MiB on v5e/v6e/v7x) so
    # large batch tiles keep full double-buffering; leave headroom below the
    # physical capacity.
    vmem_limit = int(min(0.85 * _vmem_capacity_bytes(), 100 << 20))
    return pltpu.CompilerParams(
        dimension_semantics=("parallel",),
        vmem_limit_bytes=vmem_limit)


def _pick_tile(B, tile_b, *, num_inputs, max_width, stream_itemsize):
    """Batch-tile (lane) size for the feature-major layout."""
    if tile_b is None:
        # VMEM-aware cap: double-buffered x / y stream columns + a couple of
        # live f32 intermediate rows; keep half the budget as headroom for the
        # resident weights / regalloc.
        budget = _vmem_capacity_bytes() // 2
        per_col = 4 * num_inputs * stream_itemsize + 8 * max_width
        cap = max(128, min(8192, (budget // per_col) // 128 * 128))
        if B <= 256:
            tile_b = B  # single full-extent lane block (always layout-legal)
        else:
            # >= 2 tiles so the "parallel" grid axis can span both v7x
            # TensorCores; lane-dense multiples of 128 (last tile may be ragged).
            tile_b = min(cap, _round_up(pl.cdiv(B, 2), 128))
    else:
        tile_b = int(tile_b)
        if tile_b >= B:
            tile_b = B
        else:
            tile_b = _round_up(tile_b, 128)  # keep blocks lane-dense
            if tile_b >= B:
                tile_b = B
    return tile_b, pl.cdiv(B, tile_b)


def _mlp_forward_t(h, layers, *, compute_dtype, approx_recip):
    """4x (Linear + Sigmoid), feature-major: h is (features, cols).

    Each layer: sigmoid(W @ h + b), W:(out, in), b:(out, 1) — identical to
    PyTorch's sigmoid(x @ W.T + b) in batch-major. MXU operands are
    compute_dtype with f32 accumulation; hidden activations are cast back to
    compute_dtype right after the sigmoid to halve live bytes. Returns f32.
    """
    n = len(layers)
    for idx, (w, b) in enumerate(layers):
        z = jnp.dot(w, h, preferred_element_type=jnp.float32) + b
        # exp -> EUP, reciprocal -> EUP (approx only for low-precision paths).
        a = pl.reciprocal(1.0 + jnp.exp(-z), approx=approx_recip)
        h = a if idx == n - 1 else a.astype(compute_dtype)
    return h  # f32, shape (num_inputs, cols)


def _cae_fwd_kernel(x_ref,
                    w1_ref, b1_ref, w2_ref, b2_ref,
                    w3_ref, b3_ref, w4_ref, b4_ref,
                    y_ref, *, compute_dtype, approx_recip):
    layers = ((w1_ref[...], b1_ref[...]), (w2_ref[...], b2_ref[...]),
              (w3_ref[...], b3_ref[...]), (w4_ref[...], b4_ref[...]))
    y = _mlp_forward_t(x_ref[...], layers,
                       compute_dtype=compute_dtype, approx_recip=approx_recip)
    # Ragged last tile: out-of-range columns are simply not written back by the
    # bounded output DMA (columns are independent, so no masking needed here).
    y_ref[...] = y.astype(y_ref.dtype)


def _cae_loss_kernel(x_ref,
                     w1_ref, b1_ref, w2_ref, b2_ref,
                     w3_ref, b3_ref, w4_ref, b4_ref,
                     loss_ref, *, compute_dtype, approx_recip, valid_cols):
    """Fused forward + sum((y - x)^2) for one batch tile (no y HBM writeback)."""
    x = x_ref[...]
    layers = ((w1_ref[...], b1_ref[...]), (w2_ref[...], b2_ref[...]),
              (w3_ref[...], b3_ref[...]), (w4_ref[...], b4_ref[...]))
    y = _mlp_forward_t(x, layers,
                       compute_dtype=compute_dtype, approx_recip=approx_recip)
    err = y - x.astype(jnp.float32)
    tile_b = err.shape[1]
    col = (jax.lax.broadcasted_iota(jnp.int32, err.shape, 1)
           + pl.program_id(0) * tile_b)
    err = jnp.where(col < valid_cols, err, 0.0)  # mask ragged-tile padding
    loss_ref[0] = jnp.sum(err * err)


def _layer_params(params, compute_dtype):
    # Weights stay in PyTorch (out_features, in_features) layout; biases become
    # (out_features, 1) column vectors for the feature-major broadcast.
    ws = [params[f"w{i}"].astype(compute_dtype) for i in range(1, 5)]
    bs = [params[f"b{i}"].reshape(-1, 1).astype(jnp.float32) for i in range(1, 5)]
    return ws, bs


def _wb_specs(ws, bs, single_buffer):
    # Constant index map -> fetched once and resident. pl.Buffered(1) removes
    # the (useless) second buffer, halving their VMEM footprint.
    kwargs = dict(pipeline_mode=pl.Buffered(1)) if single_buffer else {}

    def full(arr):
        return pl.BlockSpec(arr.shape, lambda i: (0, 0), **kwargs)

    specs = []
    for w, b in zip(ws, bs):
        specs += [full(w), full(b)]
    return specs


def _run_cae_call(kernel_fn, xT, ws, bs, out_shape, out_spec,
                  tile_b, num_tiles, num_inputs):
    x_spec = pl.BlockSpec((num_inputs, tile_b), lambda i: (0, i))
    cp = _compiler_params()

    def call(single_buffer_weights):
        grid_spec = pltpu.PrefetchScalarGridSpec(
            num_scalar_prefetch=0,
            grid=(num_tiles,),
            in_specs=[x_spec] + _wb_specs(ws, bs, single_buffer_weights),
            out_specs=out_spec)
        return pl.pallas_call(
            kernel_fn, out_shape=out_shape, grid_spec=grid_spec,
            compiler_params=cp,
        )(xT, ws[0], bs[0], ws[1], bs[1], ws[2], bs[2], ws[3], bs[3])

    try:
        return call(True)
    except Exception:
        # pl.Buffered(1) single-buffering unsupported on this jax version /
        # backend: fall back to default double-buffered weight blocks
        # (identical results, slightly more resident VMEM).
        return call(False)


def cae_forward_t(xT, params, *, tile_b=None,
                  compute_dtype=jnp.bfloat16, out_dtype=None):
    """Feature-major forward: xT is (num_inputs, B), returns (num_inputs, B)."""
    num_inputs, B = xT.shape
    if out_dtype is None:
        out_dtype = compute_dtype
    ws, bs = _layer_params(params, compute_dtype)
    itemsize = jnp.dtype(compute_dtype).itemsize
    tile_b, num_tiles = _pick_tile(
        B, tile_b, num_inputs=num_inputs,
        max_width=max(w.shape[0] for w in ws), stream_itemsize=itemsize)

    xk = xT.astype(compute_dtype)
    approx = jnp.dtype(compute_dtype) != jnp.dtype(jnp.float32)
    kernel = functools.partial(_cae_fwd_kernel, compute_dtype=compute_dtype,
                               approx_recip=approx)
    out_shape = jax.ShapeDtypeStruct((num_inputs, B), out_dtype)
    out_spec = pl.BlockSpec((num_inputs, tile_b), lambda i: (0, i))
    return _run_cae_call(kernel, xk, ws, bs, out_shape, out_spec,
                         tile_b, num_tiles, num_inputs)


def cae_forward(x, params, **kwargs):
    """PyTorch-semantics forward: x (B, num_inputs) -> recon (B, num_inputs)."""
    # Transposes are wrapper-side layout plumbing so the kernel stays lane-dense.
    return cae_forward_t(x.T, params, **kwargs).T


def cae_mse_loss_t(xT, params, *, tile_b=None, compute_dtype=jnp.bfloat16):
    """Fused forward + F.mse_loss(recon, x, reduction='sum'), feature-major x."""
    num_inputs, B = xT.shape
    ws, bs = _layer_params(params, compute_dtype)
    itemsize = jnp.dtype(compute_dtype).itemsize
    tile_b, num_tiles = _pick_tile(
        B, tile_b, num_inputs=num_inputs,
        max_width=max(w.shape[0] for w in ws), stream_itemsize=itemsize)

    # x is the only large HBM stream here (no y writeback) -> stream it in
    # compute_dtype (bf16 by default) to halve HBM bytes.
    xk = xT.astype(compute_dtype)
    approx = jnp.dtype(compute_dtype) != jnp.dtype(jnp.float32)
    kernel = functools.partial(_cae_loss_kernel, compute_dtype=compute_dtype,
                               approx_recip=approx, valid_cols=B)
    out_shape = jax.ShapeDtypeStruct((num_tiles,), jnp.float32)
    out_spec = pl.BlockSpec((1,), lambda i: (i,),
                            memory_space=pltpu.MemorySpace.SMEM)
    partials = _run_cae_call(kernel, xk, ws, bs, out_shape, out_spec,
                             tile_b, num_tiles, num_inputs)
    return jnp.sum(partials)


def cae_mse_loss(x, params, **kwargs):
    return cae_mse_loss_t(x.T, params, **kwargs)


def init_cae_params(key, num_inputs, num_hidden, num_outputs):
    """nn.Linear default init, PyTorch layout: w (out, in), b (out,)."""
    def linear(k, fan_in, fan_out):
        kw, kb = jax.random.split(k)
        bound = 1.0 / jnp.sqrt(fan_in)
        w = jax.random.uniform(kw, (fan_out, fan_in), jnp.float32, -bound, bound)
        b = jax.random.uniform(kb, (fan_out,), jnp.float32, -bound, bound)
        return w, b

    k1, k2, k3, k4 = jax.random.split(key, 4)
    w1, b1 = linear(k1, num_inputs, num_hidden)    # encoder_layer1
    w2, b2 = linear(k2, num_hidden, num_outputs)   # encoder_layer2
    w3, b3 = linear(k3, num_outputs, num_hidden)   # decoder[0]
    w4, b4 = linear(k4, num_hidden, num_inputs)    # decoder[2]
    return dict(w1=w1, b1=b1, w2=w2, b2=b2, w3=w3, b3=b3, w4=w4, b4=b4)


def cae_forward_ref(x, p):
    """Plain-JAX reference (batch-major, PyTorch semantics)."""
    h = x
    for i in range(1, 5):
        h = jax.nn.sigmoid(h @ p[f"w{i}"].T + p[f"b{i}"])
    return h


if __name__ == "__main__":
    num_inputs, num_hidden, num_outputs = 32, 16, 8
    batch = 300  # NOT a multiple of 128 -> exercises ragged last lane-tile
                 # (handled in-kernel; no jnp.pad HBM round trip).

    key = jax.random.PRNGKey(0)
    kx, kp = jax.random.split(key)
    x = jax.random.uniform(kx, (batch, num_inputs), jnp.float32)
    params = init_cae_params(kp, num_inputs, num_hidden, num_outputs)

    y_ref = cae_forward_ref(x, params)
    loss_ref_val = jnp.sum((y_ref - x) ** 2)

    # bf16 streams, lane-dense (batch-on-lanes) layout, 3 tiles (last ragged).
    y = jax.block_until_ready(cae_forward(x, params, tile_b=128))
    assert y.shape == (batch, num_inputs)
    assert jnp.allclose(y.astype(jnp.float32), y_ref, atol=3e-2, rtol=3e-2)

    # f32 compute path (exact reciprocal), VMEM-aware default tiling.
    y32 = jax.block_until_ready(
        cae_forward(x, params, compute_dtype=jnp.float32))
    assert y32.dtype == jnp.float32
    assert jnp.allclose(y32, y_ref, atol=1e-3, rtol=1e-3)

    # Small odd batch -> single full-extent lane tile (no padding anywhere).
    y13 = jax.block_until_ready(cae_forward(x[:13], params))
    assert y13.shape == (13, num_inputs)
    assert jnp.allclose(y13.astype(jnp.float32), y_ref[:13],
                        atol=3e-2, rtol=3e-2)

    # Fused forward + sum-MSE loss: no y HBM writeback, bf16 x stream,
    # ragged last tile masked in-kernel.
    loss = jax.block_until_ready(cae_mse_loss(x, params, tile_b=128))
    assert jnp.allclose(loss, loss_ref_val, rtol=0.15)

    print("KERNEL_OK")
</pallas_src>

<mosaic_0001>
module attributes {stable_mosaic.version = 11 : i64} {
  func.func @_cae_fwd_kernel(%arg0: i32, %arg1: memref<32x128xbf16, #tpu.memory_space<vmem>>, %arg2: memref<16x32xbf16, #tpu.memory_space<vmem>>, %arg3: memref<16x1xf32, #tpu.memory_space<vmem>>, %arg4: memref<8x16xbf16, #tpu.memory_space<vmem>>, %arg5: memref<8x1xf32, #tpu.memory_space<vmem>>, %arg6: memref<16x8xbf16, #tpu.memory_space<vmem>>, %arg7: memref<16x1xf32, #tpu.memory_space<vmem>>, %arg8: memref<32x16xbf16, #tpu.memory_space<vmem>>, %arg9: memref<32x1xf32, #tpu.memory_space<vmem>>, %arg10: memref<32x128xbf16, #tpu.memory_space<vmem>>) attributes {dimension_semantics = [#tpu.dimension_semantics<parallel>], iteration_bounds = array<i64: 3>, scalar_prefetch = 0 : i64, scratch_operands = 0 : i64, tpu.core_type = #tpu.core_type<tc>, window_params = [{transform_indices = @transform_0, window_bounds = array<i64: 32, 128>}, {pipeline_mode = #tpu.pipeline_mode<synchronous>, transform_indices = @transform_1, window_bounds = array<i64: 16, 32>}, {pipeline_mode = #tpu.pipeline_mode<synchronous>, transform_indices = @transform_2, window_bounds = array<i64: 16, 1>}, {pipeline_mode = #tpu.pipeline_mode<synchronous>, transform_indices = @transform_3, window_bounds = array<i64: 8, 16>}, {pipeline_mode = #tpu.pipeline_mode<synchronous>, transform_indices = @transform_4, window_bounds = array<i64: 8, 1>}, {pipeline_mode = #tpu.pipeline_mode<synchronous>, transform_indices = @transform_5, window_bounds = array<i64: 16, 8>}, {pipeline_mode = #tpu.pipeline_mode<synchronous>, transform_indices = @transform_6, window_bounds = array<i64: 16, 1>}, {pipeline_mode = #tpu.pipeline_mode<synchronous>, transform_indices = @transform_7, window_bounds = array<i64: 32, 16>}, {pipeline_mode = #tpu.pipeline_mode<synchronous>, transform_indices = @transform_8, window_bounds = array<i64: 32, 1>}, {transform_indices = @transform_9, window_bounds = array<i64: 32, 128>}]} {
    %c0 = arith.constant 0 : index
    %c0_0 = arith.constant 0 : index
    %0 = vector.load %arg2[%c0, %c0_0] : memref<16x32xbf16, #tpu.memory_space<vmem>>, vector<16x32xbf16>
    %c0_1 = arith.constant 0 : index
    %c0_2 = arith.constant 0 : index
    %1 = vector.load %arg3[%c0_1, %c0_2] : memref<16x1xf32, #tpu.memory_space<vmem>>, vector<16x1xf32>
    %c0_3 = arith.constant 0 : index
    %c0_4 = arith.constant 0 : index
    %2 = vector.load %arg4[%c0_3, %c0_4] : memref<8x16xbf16, #tpu.memory_space<vmem>>, vector<8x16xbf16>
    %c0_5 = arith.constant 0 : index
    %c0_6 = arith.constant 0 : index
    %3 = vector.load %arg5[%c0_5, %c0_6] : memref<8x1xf32, #tpu.memory_space<vmem>>, vector<8x1xf32>
    %c0_7 = arith.constant 0 : index
    %c0_8 = arith.constant 0 : index
    %4 = vector.load %arg6[%c0_7, %c0_8] : memref<16x8xbf16, #tpu.memory_space<vmem>>, vector<16x8xbf16>
    %c0_9 = arith.constant 0 : index
    %c0_10 = arith.constant 0 : index
    %5 = vector.load %arg7[%c0_9, %c0_10] : memref<16x1xf32, #tpu.memory_space<vmem>>, vector<16x1xf32>
    %c0_11 = arith.constant 0 : index
    %c0_12 = arith.constant 0 : index
    %6 = vector.load %arg8[%c0_11, %c0_12] : memref<32x16xbf16, #tpu.memory_space<vmem>>, vector<32x16xbf16>
    %c0_13 = arith.constant 0 : index
    %c0_14 = arith.constant 0 : index
    %7 = vector.load %arg9[%c0_13, %c0_14] : memref<32x1xf32, #tpu.memory_space<vmem>>, vector<32x1xf32>
    %c0_15 = arith.constant 0 : index
    %c0_16 = arith.constant 0 : index
    %8 = vector.load %arg1[%c0_15, %c0_16] : memref<32x128xbf16, #tpu.memory_space<vmem>>, vector<32x128xbf16>
    %cst = arith.constant dense<0.000000e+00> : vector<16x128xf32>
    %9 = tpu.matmul %0, %8, %cst {dimension_numbers = #tpu.dot_dimension_numbers<[1], [0], [0], [1], [0, 0, 1, 1], [], []>} : vector<16x32xbf16>, vector<32x128xbf16>, vector<16x128xf32> -> vector<16x128xf32>
    %10 = vector.broadcast %1 : vector<16x1xf32> to vector<16x128xf32>
    %11 = arith.addf %9, %10 : vector<16x128xf32>
    %cst_17 = arith.constant 0.000000e+00 : f32
    %12 = vector.broadcast %cst_17 : f32 to vector<16x128xf32>
    %13 = arith.subf %12, %11 : vector<16x128xf32>
    %14 = math.exp %13 : vector<16x128xf32>
    %cst_18 = arith.constant 1.000000e+00 : f32
    %15 = vector.broadcast %cst_18 : f32 to vector<16x128xf32>
    %16 = arith.addf %15, %14 : vector<16x128xf32>
    %17 = tpu.reciprocal %16 {approx = true} : vector<16x128xf32> -> vector<16x128xf32>
    %18 = arith.truncf %17 : vector<16x128xf32> to vector<16x128xbf16>
    %cst_19 = arith.constant dense<0.000000e+00> : vector<8x128xf32>
    %19 = tpu.matmul %2, %18, %cst_19 {dimension_numbers = #tpu.dot_dimension_numbers<[1], [0], [0], [1], [0, 0, 1, 1], [], []>} : vector<8x16xbf16>, vector<16x128xbf16>, vector<8x128xf32> -> vector<8x128xf32>
    %20 = vector.broadcast %3 : vector<8x1xf32> to vector<8x128xf32>
    %21 = arith.addf %19, %20 : vector<8x128xf32>
    %cst_20 = arith.constant 0.000000e+00 : f32
    %22 = vector.broadcast %cst_20 : f32 to vector<8x128xf32>
    %23 = arith.subf %22, %21 : vector<8x128xf32>
    %24 = math.exp %23 : vector<8x128xf32>
    %cst_21 = arith.constant 1.000000e+00 : f32
    %25 = vector.broadcast %cst_21 : f32 to vector<8x128xf32>
    %26 = arith.addf %25, %24 : vector<8x128xf32>
    %27 = tpu.reciprocal %26 {approx = true} : vector<8x128xf32> -> vector<8x128xf32>
    %28 = arith.truncf %27 : vector<8x128xf32> to vector<8x128xbf16>
    %cst_22 = arith.constant dense<0.000000e+00> : vector<16x128xf32>
    %29 = tpu.matmul %4, %28, %cst_22 {dimension_numbers = #tpu.dot_dimension_numbers<[1], [0], [0], [1], [0, 0, 1, 1], [], []>} : vector<16x8xbf16>, vector<8x128xbf16>, vector<16x128xf32> -> vector<16x128xf32>
    %30 = vector.broadcast %5 : vector<16x1xf32> to vector<16x128xf32>
    %31 = arith.addf %29, %30 : vector<16x128xf32>
    %cst_23 = arith.constant 0.000000e+00 : f32
    %32 = vector.broadcast %cst_23 : f32 to vector<16x128xf32>
    %33 = arith.subf %32, %31 : vector<16x128xf32>
    %34 = math.exp %33 : vector<16x128xf32>
    %cst_24 = arith.constant 1.000000e+00 : f32
    %35 = vector.broadcast %cst_24 : f32 to vector<16x128xf32>
    %36 = arith.addf %35, %34 : vector<16x128xf32>
    %37 = tpu.reciprocal %36 {approx = true} : vector<16x128xf32> -> vector<16x128xf32>
    %38 = arith.truncf %37 : vector<16x128xf32> to vector<16x128xbf16>
    %cst_25 = arith.constant dense<0.000000e+00> : vector<32x128xf32>
    %39 = tpu.matmul %6, %38, %cst_25 {dimension_numbers = #tpu.dot_dimension_numbers<[1], [0], [0], [1], [0, 0, 1, 1], [], []>} : vector<32x16xbf16>, vector<16x128xbf16>, vector<32x128xf32> -> vector<32x128xf32>
    %40 = vector.broadcast %7 : vector<32x1xf32> to vector<32x128xf32>
    %41 = arith.addf %39, %40 : vector<32x128xf32>
    %cst_26 = arith.constant 0.000000e+00 : f32
    %42 = vector.broadcast %cst_26 : f32 to vector<32x128xf32>
    %43 = arith.subf %42, %41 : vector<32x128xf32>
    %44 = math.exp %43 : vector<32x128xf32>
    %cst_27 = arith.constant 1.000000e+00 : f32
    %45 = vector.broadcast %cst_27 : f32 to vector<32x128xf32>
    %46 = arith.addf %45, %44 : vector<32x128xf32>
    %47 = tpu.reciprocal %46 {approx = true} : vector<32x128xf32> -> vector<32x128xf32>
    %48 = arith.truncf %47 : vector<32x128xf32> to vector<32x128xbf16>
    %c0_28 = arith.constant 0 : index
    %c0_29 = arith.constant 0 : index
    %49 = vector.load %arg10[%c0_28, %c0_29] : memref<32x128xbf16, #tpu.memory_space<vmem>>, vector<32x128xbf16>
    tpu.vector_store %arg10[%c0_28, %c0_29], %48 {strides = array<i32>} : memref<32x128xbf16, #tpu.memory_space<vmem>>, vector<32x128xbf16>,
    return
  }
  func.func @transform_0(%arg0: i32) -> (i32, i32) {
    %c0_i32 = arith.constant 0 : i32
    %c0_i32_0 = arith.constant 0 : i32
    return %c0_i32, %arg0 : i32, i32
  }
  func.func @transform_1(%arg0: i32) -> (i32, i32) {
    %c0_i32 = arith.constant 0 : i32
    %c0_i32_0 = arith.constant 0 : i32
    %c0_i32_1 = arith.constant 0 : i32
    return %c0_i32, %c0_i32_0 : i32, i32
  }
  func.func @transform_2(%arg0: i32) -> (i32, i32) {
    %c0_i32 = arith.constant 0 : i32
    %c0_i32_0 = arith.constant 0 : i32
    %c0_i32_1 = arith.constant 0 : i32
    return %c0_i32, %c0_i32_0 : i32, i32
  }
  func.func @transform_3(%arg0: i32) -> (i32, i32) {
    %c0_i32 = arith.constant 0 : i32
    %c0_i32_0 = arith.constant 0 : i32
    %c0_i32_1 = arith.constant 0 : i32
    return %c0_i32, %c0_i32_0 : i32, i32
  }
  func.func @transform_4(%arg0: i32) -> (i32, i32) {
    %c0_i32 = arith.constant 0 : i32
    %c0_i32_0 = arith.constant 0 : i32
    %c0_i32_1 = arith.constant 0 : i32
    return %c0_i32, %c0_i32_0 : i32, i32
  }
  func.func @transform_5(%arg0: i32) -> (i32, i32) {
    %c0_i32 = arith.constant 0 : i32
    %c0_i32_0 = arith.constant 0 : i32
    %c0_i32_1 = arith.constant 0 : i32
    return %c0_i32, %c0_i32_0 : i32, i32
  }
  func.func @transform_6(%arg0: i32) -> (i32, i32) {
    %c0_i32 = arith.constant 0 : i32
    %c0_i32_0 = arith.constant 0 : i32
    %c0_i32_1 = arith.constant 0 : i32
    return %c0_i32, %c0_i32_0 : i32, i32
  }
  func.func @transform_7(%arg0: i32) -> (i32, i32) {
    %c0_i32 = arith.constant 0 : i32
    %c0_i32_0 = arith.constant 0 : i32
    %c0_i32_1 = arith.constant 0 : i32
    return %c0_i32, %c0_i32_0 : i32, i32
  }
  func.func @transform_8(%arg0: i32) -> (i32, i32) {
    %c0_i32 = arith.constant 0 : i32
    %c0_i32_0 = arith.constant 0 : i32
    %c0_i32_1 = arith.constant 0 : i32
    return %c0_i32, %c0_i32_0 : i32, i32
  }
  func.func @transform_9(%arg0: i32) -> (i32, i32) {
    %c0_i32 = arith.constant 0 : i32
    %c0_i32_0 = arith.constant 0 : i32
    return %c0_i32, %arg0 : i32, i32
  }
}

module attributes {stable_mosaic.version = 11 : i64} {
  func.func @_cae_fwd_kernel(%arg0: i32, %arg1: memref<32x128xbf16, #tpu.memory_space<vmem>>, %arg2: memref<16x32xbf16, #tpu.memory_space<vmem>>, %arg3: memref<16x1xf32, #tpu.memory_space<vmem>>, %arg4: memref<8x16xbf16, #tpu.memory_space<vmem>>, %arg5: memref<8x1xf32, #tpu.memory_space<vmem>>, %arg6: memref<16x8xbf16, #tpu.memory_space<vmem>>, %arg7: memref<16x1xf32, #tpu.memory_space<vmem>>, %arg8: memref<32x16xbf16, #tpu.memory_space<vmem>>, %arg9: memref<32x1xf32, #tpu.memory_space<vmem>>, %arg10: memref<32x128xbf16, #tpu.memory_space<vmem>>) attributes {dimension_semantics = [#tpu.dimension_semantics<parallel>], iteration_bounds = array<i64: 3>, scalar_prefetch = 0 : i64, scratch_operands = 0 : i64, tpu.core_type = #tpu.core_type<tc>, window_params = [{transform_indices = @transform_0, window_bounds = array<i64: 32, 128>}, {pipeline_mode = #tpu.pipeline_mode<synchronous>, transform_indices = @transform_1, window_bounds = array<i64: 16, 32>}, {pipeline_mode = #tpu.pipeline_mode<synchronous>, transform_indices = @transform_2, window_bounds = array<i64: 16, 1>}, {pipeline_mode = #tpu.pipeline_mode<synchronous>, transform_indices = @transform_3, window_bounds = array<i64: 8, 16>}, {pipeline_mode = #tpu.pipeline_mode<synchronous>, transform_indices = @transform_4, window_bounds = array<i64: 8, 1>}, {pipeline_mode = #tpu.pipeline_mode<synchronous>, transform_indices = @transform_5, window_bounds = array<i64: 16, 8>}, {pipeline_mode = #tpu.pipeline_mode<synchronous>, transform_indices = @transform_6, window_bounds = array<i64: 16, 1>}, {pipeline_mode = #tpu.pipeline_mode<synchronous>, transform_indices = @transform_7, window_bounds = array<i64: 32, 16>}, {pipeline_mode = #tpu.pipeline_mode<synchronous>, transform_indices = @transform_8, window_bounds = array<i64: 32, 1>}, {transform_indices = @transform_9, window_bounds = array<i64: 32, 128>}]} {
    %c0 = arith.constant 0 : index
    %c0_0 = arith.constant 0 : index
    %0 = vector.load %arg2[%c0, %c0_0] : memref<16x32xbf16, #tpu.memory_space<vmem>>, vector<16x32xbf16>
    %c0_1 = arith.constant 0 : index
    %c0_2 = arith.constant 0 : index
    %1 = vector.load %arg3[%c0_1, %c0_2] : memref<16x1xf32, #tpu.memory_space<vmem>>, vector<16x1xf32>
    %c0_3 = arith.constant 0 : index
    %c0_4 = arith.constant 0 : index
    %2 = vector.load %arg4[%c0_3, %c0_4] : memref<8x16xbf16, #tpu.memory_space<vmem>>, vector<8x16xbf16>
    %c0_5 = arith.constant 0 : index
    %c0_6 = arith.constant 0 : index
    %3 = vector.load %arg5[%c0_5, %c0_6] : memref<8x1xf32, #tpu.memory_space<vmem>>, vector<8x1xf32>
    %c0_7 = arith.constant 0 : index
    %c0_8 = arith.constant 0 : index
    %4 = vector.load %arg6[%c0_7, %c0_8] : memref<16x8xbf16, #tpu.memory_space<vmem>>, vector<16x8xbf16>
    %c0_9 = arith.constant 0 : index
    %c0_10 = arith.constant 0 : index
    %5 = vector.load %arg7[%c0_9, %c0_10] : memref<16x1xf32, #tpu.memory_space<vmem>>, vector<16x1xf32>
    %c0_11 = arith.constant 0 : index
    %c0_12 = arith.constant 0 : index
    %6 = vector.load %arg8[%c0_11, %c0_12] : memref<32x16xbf16, #tpu.memory_space<vmem>>, vector<32x16xbf16>
    %c0_13 = arith.constant 0 : index
    %c0_14 = arith.constant 0 : index
    %7 = vector.load %arg9[%c0_13, %c0_14] : memref<32x1xf32, #tpu.memory_space<vmem>>, vector<32x1xf32>
    %c0_15 = arith.constant 0 : index
    %c0_16 = arith.constant 0 : index
    %8 = vector.load %arg1[%c0_15, %c0_16] : memref<32x128xbf16, #tpu.memory_space<vmem>>, vector<32x128xbf16>
    %cst = arith.constant dense<0.000000e+00> : vector<16x128xf32>
    %9 = tpu.matmul %0, %8, %cst {dimension_numbers = #tpu.dot_dimension_numbers<[1], [0], [0], [1], [0, 0, 1, 1], [], []>} : vector<16x32xbf16>, vector<32x128xbf16>, vector<16x128xf32> -> vector<16x128xf32>
    %10 = vector.broadcast %1 : vector<16x1xf32> to vector<16x128xf32>
    %11 = arith.addf %9, %10 : vector<16x128xf32>
    %cst_17 = arith.constant 0.000000e+00 : f32
    %12 = vector.broadcast %cst_17 : f32 to vector<16x128xf32>
    %13 = arith.subf %12, %11 : vector<16x128xf32>
    %14 = math.exp %13 : vector<16x128xf32>
    %cst_18 = arith.constant 1.000000e+00 : f32
    %15 = vector.broadcast %cst_18 : f32 to vector<16x128xf32>
    %16 = arith.addf %15, %14 : vector<16x128xf32>
    %17 = tpu.reciprocal %16 {approx = true} : vector<16x128xf32> -> vector<16x128xf32>
    %18 = arith.truncf %17 : vector<16x128xf32> to vector<16x128xbf16>
    %cst_19 = arith.constant dense<0.000000e+00> : vector<8x128xf32>
    %19 = tpu.matmul %2, %18, %cst_19 {dimension_numbers = #tpu.dot_dimension_numbers<[1], [0], [0], [1], [0, 0, 1, 1], [], []>} : vector<8x16xbf16>, vector<16x128xbf16>, vector<8x128xf32> -> vector<8x128xf32>
    %20 = vector.broadcast %3 : vector<8x1xf32> to vector<8x128xf32>
    %21 = arith.addf %19, %20 : vector<8x128xf32>
    %cst_20 = arith.constant 0.000000e+00 : f32
    %22 = vector.broadcast %cst_20 : f32 to vector<8x128xf32>
    %23 = arith.subf %22, %21 : vector<8x128xf32>
    %24 = math.exp %23 : vector<8x128xf32>
    %cst_21 = arith.constant 1.000000e+00 : f32
    %25 = vector.broadcast %cst_21 : f32 to vector<8x128xf32>
    %26 = arith.addf %25, %24 : vector<8x128xf32>
    %27 = tpu.reciprocal %26 {approx = true} : vector<8x128xf32> -> vector<8x128xf32>
    %28 = arith.truncf %27 : vector<8x128xf32> to vector<8x128xbf16>
    %cst_22 = arith.constant dense<0.000000e+00> : vector<16x128xf32>
    %29 = tpu.matmul %4, %28, %cst_22 {dimension_numbers = #tpu.dot_dimension_numbers<[1], [0], [0], [1], [0, 0, 1, 1], [], []>} : vector<16x8xbf16>, vector<8x128xbf16>, vector<16x128xf32> -> vector<16x128xf32>
    %30 = vector.broadcast %5 : vector<16x1xf32> to vector<16x128xf32>
    %31 = arith.addf %29, %30 : vector<16x128xf32>
    %cst_23 = arith.constant 0.000000e+00 : f32
    %32 = vector.broadcast %cst_23 : f32 to vector<16x128xf32>
    %33 = arith.subf %32, %31 : vector<16x128xf32>
    %34 = math.exp %33 : vector<16x128xf32>
    %cst_24 = arith.constant 1.000000e+00 : f32
    %35 = vector.broadcast %cst_24 : f32 to vector<16x128xf32>
    %36 = arith.addf %35, %34 : vector<16x128xf32>
    %37 = tpu.reciprocal %36 {approx = true} : vector<16x128xf32> -> vector<16x128xf32>
    %38 = arith.truncf %37 : vector<16x128xf32> to vector<16x128xbf16>
    %cst_25 = arith.constant dense<0.000000e+00> : vector<32x128xf32>
    %39 = tpu.matmul %6, %38, %cst_25 {dimension_numbers = #tpu.dot_dimension_numbers<[1], [0], [0], [1], [0, 0, 1, 1], [], []>} : vector<32x16xbf16>, vector<16x128xbf16>, vector<32x128xf32> -> vector<32x128xf32>
    %40 = vector.broadcast %7 : vector<32x1xf32> to vector<32x128xf32>
    %41 = arith.addf %39, %40 : vector<32x128xf32>
    %cst_26 = arith.constant 0.000000e+00 : f32
    %42 = vector.broadcast %cst_26 : f32 to vector<32x128xf32>
    %43 = arith.subf %42, %41 : vector<32x128xf32>
    %44 = math.exp %43 : vector<32x128xf32>
    %cst_27 = arith.constant 1.000000e+00 : f32
    %45 = vector.broadcast %cst_27 : f32 to vector<32x128xf32>
    %46 = arith.addf %45, %44 : vector<32x128xf32>
    %47 = tpu.reciprocal %46 {approx = true} : vector<32x128xf32> -> vector<32x128xf32>
    %48 = arith.truncf %47 : vector<32x128xf32> to vector<32x128xbf16>
    %c0_28 = arith.constant 0 : index
    %c0_29 = arith.constant 0 : index
    %49 = vector.load %arg10[%c0_28, %c0_29] : memref<32x128xbf16, #tpu.memory_space<vmem>>, vector<32x128xbf16>
    tpu.vector_store %arg10[%c0_28, %c0_29], %48 {strides = array<i32>} : memref<32x128xbf16, #tpu.memory_space<vmem>>, vector<32x128xbf16>,
    return
  }
  func.func @transform_0(%arg0: i32) -> (i32, i32) {
    %c0_i32 = arith.constant 0 : i32
    %c0_i32_0 = arith.constant 0 : i32
    return %c0_i32, %arg0 : i32, i32
  }
  func.func @transform_1(%arg0: i32) -> (i32, i32) {
    %c0_i32 = arith.constant 0 : i32
    %c0_i32_0 = arith.constant 0 : i32
    %c0_i32_1 = arith.constant 0 : i32
    return %c0_i32, %c0_i32_0 : i32, i32
  }
  func.func @transform_2(%arg0: i32) -> (i32, i32) {
    %c0_i32 = arith.constant 0 : i32
    %c0_i32_0 = arith.constant 0 : i32
    %c0_i32_1 = arith.constant 0 : i32
    return %c0_i32, %c0_i32_0 : i32, i32
  }
  func.func @transform_3(%arg0: i32) -> (i32, i32) {
    %c0_i32 = arith.constant 0 : i32
    %c0_i32_0 = arith.constant 0 : i32
    %c0_i32_1 = arith.constant 0 : i32
    return %c0_i32, %c0_i32_0 : i32, i32
  }
  func.func @transform_4(%arg0: i32) -> (i32, i32) {
    %c0_i32 = arith.constant 0 : i32
    %c0_i32_0 = arith.constant 0 : i32
    %c0_i32_1 = arith.constant 0 : i32
    return %c0_i32, %c0_i32_0 : i32, i32
  }
  func.func @transform_5(%arg0: i32) -> (i32, i32) {
    %c0_i32 = arith.constant 0 : i32
    %c0_i32_0 = arith.constant 0 : i32
    %c0_i32_1 = arith.constant 0 : i32
    return %c0_i32, %c0_i32_0 : i32, i32
  }
  func.func @transform_6(%arg0: i32) -> (i32, i32) {
    %c0_i32 = arith.constant 0 : i32
    %c0_i32_0 = arith.constant 0 : i32
    %c0_i32_1 = arith.constant 0 : i32
    return %c0_i32, %c0_i32_0 : i32, i32
  }
  func.func @transform_7(%arg0: i32) -> (i32, i32) {
    %c0_i32 = arith.constant 0 : i32
    %c0_i32_0 = arith.constant 0 : i32
    %c0_i32_1 = arith.constant 0 : i32
    return %c0_i32, %c0_i32_0 : i32, i32
  }
  func.func @transform_8(%arg0: i32) -> (i32, i32) {
    %c0_i32 = arith.constant 0 : i32
    %c0_i32_0 = arith.constant 0 : i32
    %c0_i32_1 = arith.constant 0 : i32
    return %c0_i32, %c0_i32_0 : i32, i32
  }
  func.func @transform_9(%arg0: i32) -> (i32, i32) {
    %c0_i32 = arith.constant 0 : i32
    %c0_i32_0 = arith.constant 0 : i32
    return %c0_i32, %arg0 : i32, i32
  }
}

</mosaic_0001>

<llo_original>
// kernel: tpu_custom_call.1
$region0: #{tpu_custom_call.1}
  #allocation0 [shape = 'u32[]', space=smem, size = 0x4, offset = 0x4, fixed_abs, tag = 'smem constant byte address 0x4 - core index']
  #allocation1 [shape = 'u32[144,128]{1,0:T(1,128)}', space=vmem, size = 0x12000, scoped, tag = 'internal scratch']
  %s0 = inlined_call_operand.vmem [shape: bf16[32,300], index: 0, kind: input, shape index: {}]
  %s1 = inlined_call_operand.vmem [shape: bf16[16,32], index: 1, kind: input, shape index: {}]
  %s2 = inlined_call_operand.vmem [shape: f32[16,1], index: 2, kind: input, shape index: {}]
  %s3 = inlined_call_operand.vmem [shape: bf16[8,16], index: 3, kind: input, shape index: {}]
  %s4 = inlined_call_operand.vmem [shape: f32[8,1], index: 4, kind: input, shape index: {}]
  %s5 = inlined_call_operand.vmem [shape: bf16[16,8], index: 5, kind: input, shape index: {}]
  %s6 = inlined_call_operand.vmem [shape: f32[16,1], index: 6, kind: input, shape index: {}]
  %s7 = inlined_call_operand.vmem [shape: bf16[32,16], index: 7, kind: input, shape index: {}]
  %s8 = inlined_call_operand.vmem [shape: f32[32,1], index: 8, kind: input, shape index: {}]
  %s9 = inlined_call_operand.hbm [shape: bf16[32,300], index: 9, kind: output, shape index: {}]
  %s10 = sld [smem:[#allocation0]]
  $region110: #{tpu_custom_call.1} parent=0
    _
  %s12 = ssub.s32 1, %s10
  %s13 = scalar_select 0, %s12, %s10
  $region1: #{tpu_custom_call.1} parent=0
    #allocation2 [shape = 'u8[16384]{0}', space=vmem, size = 0x4000, scoped, tag = 'input window, operand 0']
    #allocation3 [shape = 'u8[16384]{0}', space=vmem, size = 0x4000, scoped, tag = 'output window, operand 0']
    #allocation4 [shape = 's32[2]{0}', space=sflag, size = 0x8, scoped, tag = 'scoped memory for tpu_custom_call.1']
    %14 = vsyncpa [#allocation4], 0
    %s15 = scalar_lea.sflag [#allocation4], 1
    %16 = vsyncpa %s15, 0
    loop: start=0, step=1, limit=5
    $region2: #{tpu_custom_call.1} parent=1 // loop_pre_header
      _
    $region3: #{tpu_custom_call.1} parent=1 // loop_header
      %s18 = sphi 0, %s22
      %p19 = scmp.ge.s32.totalorder %s18, 5
      %s28 = sphi 0, %s30
      %s31 = sphi 0, %s28
      %s32 = sphi 0, %s31
      %s48 = sphi 0, %s32
      %s52 = sphi 0, %s52
      %s54 = sphi 0, %s52
      %s55 = sphi 0, %s54
      %s69 = sphi 0, %s55
      %s73 = sphi 0, %s73
      %s75 = sphi 0, %s73
      %s76 = sphi 0, %s75
      %s90 = sphi 0, %s76
      %s94 = sphi 0, %s94
      %s96 = sphi 0, %s94
      %s97 = sphi 0, %s96
      %s111 = sphi 0, %s97
      %s115 = sphi 0, %s115
      %s117 = sphi 0, %s115
      %s118 = sphi 0, %s117
      %s132 = sphi 0, %s118
      %s136 = sphi 0, %s136
      %s138 = sphi 0, %s136
      %s139 = sphi 0, %s138
      %s153 = sphi 0, %s139
      %s157 = sphi 0, %s157
      %s159 = sphi 0, %s157
      %s160 = sphi 0, %s159
      %s174 = sphi 0, %s160
      %s178 = sphi 0, %s178
      %s180 = sphi 0, %s178
      %s181 = sphi 0, %s180
      %s195 = sphi 0, %s181
      %s199 = sphi 0, %s199
      %s201 = sphi 0, %s199
      %s202 = sphi 0, %s201
      %s216 = sphi 0, %s202
      %s222 = sphi 0, %s224
      %s225 = sphi 0, %s222
      %s226 = sphi 0, %s225
      %s242 = sphi 0, %s226
    $region4: #{tpu_custom_call.1} parent=1 // loop_header_branch
      %21 = sbr.rel (%p19) target = $region8
    $region5: #{tpu_custom_call.1} parent=1 // loop_body
      %s23 = ssub.s32 %s18, 1
      %s24 = ssub.s32 %s18, 2
      %s25 = sadd.s32 %s18, 1
      %s26 = ssub.s32 %s18, %s25
      %p27 = scmp.eq.s32.totalorder %s26, 0
      %s29 = sadd.s32 %s28, 1
      %s30 = scalar_select %p27, %s28, %s29
      %p33 = pneg %p27
      %p34 = scmp.eq.s32.totalorder %s18, 2
      %p35 = por %p33, %p34
      %p36 = scmp.ne.s32.totalorder %s28, %s31
      %p37 = scmp.eq.s32.totalorder %s18, 0
      %p38 = por %p36, %p37
      %p39 = scmp.ne.s32.totalorder %s28, %s31
      %p40 = scmp.eq.s32.totalorder %s23, 2
      %p41 = por %p39, %p40
      %p42 = scmp.ne.s32.totalorder %s31, %s32
      %p43 = scmp.eq.s32.totalorder %s23, 0
      %p44 = por %p42, %p43
      %p45 = scmp.ne.s32.totalorder %s31, %s32
      %p46 = scmp.eq.s32.totalorder %s24, 2
      %p47 = por %p45, %p46
      %p49 = scmp.ne.s32.totalorder %s32, %s48
      %p50 = scmp.eq.s32.totalorder %s24, 0
      %p51 = por %p49, %p50
      %s53 = sadd.s32 %s52, 1
      %p56 = scmp.eq.s32.totalorder %s18, 2
      %p57 = scmp.ne.s32.totalorder %s52, %s54
      %p58 = scmp.eq.s32.totalorder %s18, 0
      %p59 = por %p57, %p58
      %p60 = scmp.ne.s32.totalorder %s52, %s54
      %p61 = scmp.eq.s32.totalorder %s23, 2
      %p62 = por %p60, %p61
      %p63 = scmp.ne.s32.totalorder %s54, %s55
      %p64 = scmp.eq.s32.totalorder %s23, 0
      %p65 = por %p63, %p64
      %p66 = scmp.ne.s32.totalorder %s54, %s55
      %p67 = scmp.eq.s32.totalorder %s24, 2
      %p68 = por %p66, %p67
      %p70 = scmp.ne.s32.totalorder %s55, %s69
      %p71 = scmp.eq.s32.totalorder %s24, 0
      %p72 = por %p70, %p71
      %s74 = sadd.s32 %s73, 1
      %p77 = scmp.eq.s32.totalorder %s18, 2
      %p78 = scmp.ne.s32.totalorder %s73, %s75
      %p79 = scmp.eq.s32.totalorder %s18, 0
      %p80 = por %p78, %p79
      %p81 = scmp.ne.s32.totalorder %s73, %s75
      %p82 = scmp.eq.s32.totalorder %s23, 2
      %p83 = por %p81, %p82
      %p84 = scmp.ne.s32.totalorder %s75, %s76
      %p85 = scmp.eq.s32.totalorder %s23, 0
      %p86 = por %p84, %p85
      %p87 = scmp.ne.s32.totalorder %s75, %s76
      %p88 = scmp.eq.s32.totalorder %s24, 2
      %p89 = por %p87, %p88
      %p91 = scmp.ne.s32.totalorder %s76, %s90
      %p92 = scmp.eq.s32.totalorder %s24, 0
      %p93 = por %p91, %p92
      %s95 = sadd.s32 %s94, 1
      %p98 = scmp.eq.s32.totalorder %s18, 2
      %p99 = scmp.ne.s32.totalorder %s94, %s96
      %p100 = scmp.eq.s32.totalorder %s18, 0
      %p101 = por %p99, %p100
      %p102 = scmp.ne.s32.totalorder %s94, %s96
      %p103 = scmp.eq.s32.totalorder %s23, 2
      %p104 = por %p102, %p103
      %p105 = scmp.ne.s32.totalorder %s96, %s97
      %p106 = scmp.eq.s32.totalorder %s23, 0
      %p107 = por %p105, %p106
      %p108 = scmp.ne.s32.totalorder %s96, %s97
      %p109 = scmp.eq.s32.totalorder %s24, 2
      %p110 = por %p108, %p109
      %p112 = scmp.ne.s32.totalorder %s97, %s111
      %p113 = scmp.eq.s32.totalorder %s24, 0
      %p114 = por %p112, %p113
      %s116 = sadd.s32 %s115, 1
      %p119 = scmp.eq.s32.totalorder %s18, 2
      %p120 = scmp.ne.s32.totalorder %s115, %s117
      %p121 = scmp.eq.s32.totalorder %s18, 0
      %p122 = por %p120, %p121
      %p123 = scmp.ne.s32.totalorder %s115, %s117
      %p124 = scmp.eq.s32.totalorder %s23, 2
      %p125 = por %p123, %p124
      %p126 = scmp.ne.s32.totalorder %s117, %s118
      %p127 = scmp.eq.s32.totalorder %s23, 0
      %p128 = por %p126, %p127
      %p129 = scmp.ne.s32.totalorder %s117, %s118
      %p130 = scmp.eq.s32.totalorder %s24, 2
      %p131 = por %p129, %p130
      %p133 = scmp.ne.s32.totalorder %s118, %s132
      %p134 = scmp.eq.s32.totalorder %s24, 0
      %p135 = por %p133, %p134
      %s137 = sadd.s32 %s136, 1
      %p140 = scmp.eq.s32.totalorder %s18, 2
      %p141 = scmp.ne.s32.totalorder %s136, %s138
      %p142 = scmp.eq.s32.totalorder %s18, 0
      %p143 = por %p141, %p142
      %p144 = scmp.ne.s32.totalorder %s136, %s138
      %p145 = scmp.eq.s32.totalorder %s23, 2
      %p146 = por %p144, %p145
      %p147 = scmp.ne.s32.totalorder %s138, %s139
      %p148 = scmp.eq.s32.totalorder %s23, 0
      %p149 = por %p147, %p148
      %p150 = scmp.ne.s32.totalorder %s138, %s139
      %p151 = scmp.eq.s32.totalorder %s24, 2
      %p152 = por %p150, %p151
      %p154 = scmp.ne.s32.totalorder %s139, %s153
      %p155 = scmp.eq.s32.totalorder %s24, 0
      %p156 = por %p154, %p155
      %s158 = sadd.s32 %s157, 1
      %p161 = scmp.eq.s32.totalorder %s18, 2
      %p162 = scmp.ne.s32.totalorder %s157, %s159
      %p163 = scmp.eq.s32.totalorder %s18, 0
      %p164 = por %p162, %p163
      %p165 = scmp.ne.s32.totalorder %s157, %s159
      %p166 = scmp.eq.s32.totalorder %s23, 2
      %p167 = por %p165, %p166
      %p168 = scmp.ne.s32.totalorder %s159, %s160
      %p169 = scmp.eq.s32.totalorder %s23, 0
      %p170 = por %p168, %p169
      %p171 = scmp.ne.s32.totalorder %s159, %s160
      %p172 = scmp.eq.s32.totalorder %s24, 2
      %p173 = por %p171, %p172
      %p175 = scmp.ne.s32.totalorder %s160, %s174
      %p176 = scmp.eq.s32.totalorder %s24, 0
      %p177 = por %p175, %p176
      %s179 = sadd.s32 %s178, 1
      %p182 = scmp.eq.s32.totalorder %s18, 2
      %p183 = scmp.ne.s32.totalorder %s178, %s180
      %p184 = scmp.eq.s32.totalorder %s18, 0
      %p185 = por %p183, %p184
      %p186 = scmp.ne.s32.totalorder %s178, %s180
      %p187 = scmp.eq.s32.totalorder %s23, 2
      %p188 = por %p186, %p187
      %p189 = scmp.ne.s32.totalorder %s180, %s181
      %p190 = scmp.eq.s32.totalorder %s23, 0
      %p191 = por %p189, %p190
      %p192 = scmp.ne.s32.totalorder %s180, %s181
      %p193 = scmp.eq.s32.totalorder %s24, 2
      %p194 = por %p192, %p193
      %p196 = scmp.ne.s32.totalorder %s181, %s195
      %p197 = scmp.eq.s32.totalorder %s24, 0
      %p198 = por %p196, %p197
      %s200 = sadd.s32 %s199, 1
      %p203 = scmp.eq.s32.totalorder %s18, 2
      %p204 = scmp.ne.s32.totalorder %s199, %s201
      %p205 = scmp.eq.s32.totalorder %s18, 0
      %p206 = por %p204, %p205
      %p207 = scmp.ne.s32.totalorder %s199, %s201
      %p208 = scmp.eq.s32.totalorder %s23, 2
      %p209 = por %p207, %p208
      %p210 = scmp.ne.s32.totalorder %s201, %s202
      %p211 = scmp.eq.s32.totalorder %s23, 0
      %p212 = por %p210, %p211
      %p213 = scmp.ne.s32.totalorder %s201, %s202
      %p214 = scmp.eq.s32.totalorder %s24, 2
      %p215 = por %p213, %p214
      %p217 = scmp.ne.s32.totalorder %s202, %s216
      %p218 = scmp.eq.s32.totalorder %s24, 0
      %p219 = por %p217, %p218
      %s220 = ssub.s32 %s18, %s25
      %p221 = scmp.eq.s32.totalorder %s220, 0
      %s223 = sadd.s32 %s222, 1
      %s224 = scalar_select %p221, %s222, %s223
      %p227 = pneg %p221
      %p228 = scmp.eq.s32.totalorder %s18, 2
      %p229 = por %p227, %p228
      %p230 = scmp.ne.s32.totalorder %s222, %s225
      %p231 = scmp.eq.s32.totalorder %s18, 0
      %p232 = por %p230, %p231
      %p233 = scmp.ne.s32.totalorder %s222, %s225
      %p234 = scmp.eq.s32.totalorder %s23, 2
      %p235 = por %p233, %p234
      %p236 = scmp.ne.s32.totalorder %s225, %s226
      %p237 = scmp.eq.s32.totalorder %s23, 0
      %p238 = por %p236, %p237
      %p239 = scmp.ne.s32.totalorder %s225, %s226
      %p240 = scmp.eq.s32.totalorder %s24, 2
      %p241 = por %p239, %p240
      %p243 = scmp.ne.s32.totalorder %s226, %s242
      %p244 = scmp.eq.s32.totalorder %s24, 0
      %p245 = por %p243, %p244
      %p246 = scmp.le.s32.totalorder 1, %s18
      %p247 = scmp.lt.s32.totalorder %s18, 4
      %p248 = pnand %p246, %p247
      %p249 = pneg %p248
      // Predicated region
      $region9: #{tpu_custom_call.1} parent=5 // pred_check
        _
      $region10: #{tpu_custom_call.1} parent=5 // pred_check_branch
        %251 = sbr.rel (%p248) target = $region12
      $region11: #{tpu_custom_call.1} parent=5 // pred_region
        %s252 = ssub.s32 %s18, 1
        // Predicated region
        $region13: #{tpu_custom_call.1} parent=11 // pred_check
          %p253 = pneg %p65
        $region14: #{tpu_custom_call.1} parent=11 // pred_check_branch
          %255 = sbr.rel (%p253) target = $region16
        $region15: #{tpu_custom_call.1} parent=11 // pred_region
          _
        $region16: #{tpu_custom_call.1} parent=11 // pred_fallthru
          _
        // Predicated region
        $region17: #{tpu_custom_call.1} parent=11 // pred_check
          %p256 = pneg %p86
        $region18: #{tpu_custom_call.1} parent=11 // pred_check_branch
          %258 = sbr.rel (%p256) target = $region20
        $region19: #{tpu_custom_call.1} parent=11 // pred_region
          _
        $region20: #{tpu_custom_call.1} parent=11 // pred_fallthru
          _
        // Predicated region
        $region21: #{tpu_custom_call.1} parent=11 // pred_check
          %p259 = pneg %p107
        $region22: #{tpu_custom_call.1} parent=11 // pred_check_branch
          %261 = sbr.rel (%p259) target = $region24
        $region23: #{tpu_custom_call.1} parent=11 // pred_region
          _
        $region24: #{tpu_custom_call.1} parent=11 // pred_fallthru
          _
        // Predicated region
        $region25: #{tpu_custom_call.1} parent=11 // pred_check
          %p262 = pneg %p128
        $region26: #{tpu_custom_call.1} parent=11 // pred_check_branch
          %264 = sbr.rel (%p262) target = $region28
        $region27: #{tpu_custom_call.1} parent=11 // pred_region
          _
        $region28: #{tpu_custom_call.1} parent=11 // pred_fallthru
          _
        // Predicated region
        $region29: #{tpu_custom_call.1} parent=11 // pred_check
          %p265 = pneg %p149
        $region30: #{tpu_custom_call.1} parent=11 // pred_check_branch
          %267 = sbr.rel (%p265) target = $region32
        $region31: #{tpu_custom_call.1} parent=11 // pred_region
          _
        $region32: #{tpu_custom_call.1} parent=11 // pred_fallthru
          _
        // Predicated region
        $region33: #{tpu_custom_call.1} parent=11 // pred_check
          %p268 = pneg %p170
        $region34: #{tpu_custom_call.1} parent=11 // pred_check_branch
          %270 = sbr.rel (%p268) target = $region36
        $region35: #{tpu_custom_call.1} parent=11 // pred_region
          _
        $region36: #{tpu_custom_call.1} parent=11 // pred_fallthru
          _
        // Predicated region
        $region37: #{tpu_custom_call.1} parent=11 // pred_check
          %p271 = pneg %p191
        $region38: #{tpu_custom_call.1} parent=11 // pred_check_branch
          %273 = sbr.rel (%p271) target = $region40
        $region39: #{tpu_custom_call.1} parent=11 // pred_region
          _
        $region40: #{tpu_custom_call.1} parent=11 // pred_fallthru
          _
        // Predicated region
        $region41: #{tpu_custom_call.1} parent=11 // pred_check
          %p274 = pneg %p212
        $region42: #{tpu_custom_call.1} parent=11 // pred_check_branch
          %276 = sbr.rel (%p274) target = $region44
        $region43: #{tpu_custom_call.1} parent=11 // pred_region
          _
        $region44: #{tpu_custom_call.1} parent=11 // pred_fallthru
          _
      $region12: #{tpu_custom_call.1} parent=5 // pred_fallthru
        _
      %p277 = scmp.lt.s32.totalorder %s18, 3
      // Predicated region
      $region45: #{tpu_custom_call.1} parent=5 // pred_check
        %p278 = pneg %p277
      $region46: #{tpu_custom_call.1} parent=5 // pred_check_branch
        %280 = sbr.rel (%p278) target = $region48
      $region47: #{tpu_custom_call.1} parent=5 // pred_region
        // Predicated region
        $region49: #{tpu_custom_call.1} parent=47 // pred_check
          %p281 = pneg %p38
        $region50: #{tpu_custom_call.1} parent=47 // pred_check_branch
          %283 = sbr.rel (%p281) target = $region52
        $region51: #{tpu_custom_call.1} parent=47 // pred_region
          %s284 = sand.u32 %s28, 1
          %s285 = sand.u32 %s28, 1
          %s286 = smul.addr %s285, 16
          %s287 = scalar_lea.vmem [#allocation2], %s286
          %s288 = smul.addr %s18, 4
          %s289 = scalar_lea.vmem %s0, %s288
          // Predicated region
          $region53: #{tpu_custom_call.1} parent=51 // pred_check
            _
          $region54: #{tpu_custom_call.1} parent=51 // pred_check_branch
            %291 = sbr.rel (0) target = $region56
          $region55: #{tpu_custom_call.1} parent=51 // pred_region
            // Predicated region
            $region57: #{tpu_custom_call.1} parent=55 // pred_check
              _
            $region58: #{tpu_custom_call.1} parent=55 // pred_check_branch
              %293 = sbr.rel target = $region60
            $region59: #{tpu_custom_call.1} parent=55 // pred_region
              // Predicated region
              $region72: #{tpu_custom_call.1} parent=59 // pred_check
                _
              $region73: #{tpu_custom_call.1} parent=59 // pred_check_branch
                %314 = sbr.rel (0) target = $region75
              $region74: #{tpu_custom_call.1} parent=59 // pred_region
                loop: start=0, step=1, limit=1
                $region76: #{tpu_custom_call.1} parent=74 // loop_pre_header
                  _
                $region77: #{tpu_custom_call.1} parent=74 // loop_header
                  %s316 = sphi 0, %s320
                  %p317 = scmp.ge.s32.totalorder %s316, 1
                  %s321 = sphi %s289, %s289
                  %s322 = sphi %s287, %s287
                $region78: #{tpu_custom_call.1} parent=74 // loop_header_branch
                  %319 = sbr.rel (%p317) target = $region82
                $region79: #{tpu_custom_call.1} parent=74 // loop_body
                  _
                $region80: #{tpu_custom_call.1} parent=74 // loop_footer
                  %s320 = sadd.s32 1, %s316
                $region81: #{tpu_custom_call.1} parent=74 // loop_footer_branch
                  %315 = sbr.rel target = $region77
                $region82: #{tpu_custom_call.1} parent=74 // loop_exit
                  _
                loop: start=0, step=1, limit=1
                $region83: #{tpu_custom_call.1} parent=74 // loop_pre_header
                  _
                $region84: #{tpu_custom_call.1} parent=74 // loop_header
                  %s325 = sphi 0, %s329
                  %p326 = scmp.ge.s32.totalorder %s325, 1
                  %s330 = sphi %s289, %s289
                  %s331 = sphi %s287, %s287
                $region85: #{tpu_custom_call.1} parent=74 // loop_header_branch
                  %328 = sbr.rel (%p326) target = $region89
                $region86: #{tpu_custom_call.1} parent=74 // loop_body
                  %v332 = vld [vmem:[%s330] sm:$0xf]
                  %333 = vst [vmem:[%s331] sm:$0xf] %v332
                  %v334 = vld [vmem:[%s330 + $0xc] sm:$0xf]
                  %335 = vst [vmem:[%s331 + $0x4] sm:$0xf] %v334
                  %v336 = vld [vmem:[%s330 + $0x18] sm:$0xf]
                  %337 = vst [vmem:[%s331 + $0x8] sm:$0xf] %v336
                  %v338 = vld [vmem:[%s330 + $0x24] sm:$0xf]
                  %339 = vst [vmem:[%s331 + $0xc] sm:$0xf] %v338
                $region87: #{tpu_custom_call.1} parent=74 // loop_footer
                  %s329 = sadd.s32 1, %s325
                $region88: #{tpu_custom_call.1} parent=74 // loop_footer_branch
                  %324 = sbr.rel target = $region84
                $region89: #{tpu_custom_call.1} parent=74 // loop_exit
                  _
              $region75: #{tpu_custom_call.1} parent=59 // pred_fallthru
                _
            $region60: #{tpu_custom_call.1} parent=55 // pred_fallthru
              _
            // Predicated region
            $region61: #{tpu_custom_call.1} parent=55 // pred_check
              _
            $region62: #{tpu_custom_call.1} parent=55 // pred_check_branch
              %295 = sbr.rel (0) target = $region64
            $region63: #{tpu_custom_call.1} parent=55 // pred_region
              loop: start=0, step=1, limit=1
              $region65: #{tpu_custom_call.1} parent=63 // loop_pre_header
                _
              $region66: #{tpu_custom_call.1} parent=63 // loop_header
                %s298 = sphi 0, %s302
                %p299 = scmp.ge.s32.totalorder %s298, 1
                %s303 = sphi %s289, %s289
                %s304 = sphi %s287, %s287
              $region67: #{tpu_custom_call.1} parent=63 // loop_header_branch
                %301 = sbr.rel (%p299) target = $region71
              $region68: #{tpu_custom_call.1} parent=63 // loop_body
                %v305 = vld [vmem:[%s303] sm:$0xf]
                %306 = vst [vmem:[%s304] sm:$0xf] %v305
                %v307 = vld [vmem:[%s303 + $0xc] sm:$0xf]
                %308 = vst [vmem:[%s304 + $0x4] sm:$0xf] %v307
                %v309 = vld [vmem:[%s303 + $0x18] sm:$0xf]
                %310 = vst [vmem:[%s304 + $0x8] sm:$0xf] %v309
                %v311 = vld [vmem:[%s303 + $0x24] sm:$0xf]
                %312 = vst [vmem:[%s304 + $0xc] sm:$0xf] %v311
              $region69: #{tpu_custom_call.1} parent=63 // loop_footer
                %s302 = sadd.s32 1, %s298
              $region70: #{tpu_custom_call.1} parent=63 // loop_footer_branch
                %297 = sbr.rel target = $region66
              $region71: #{tpu_custom_call.1} parent=63 // loop_exit
                _
            $region64: #{tpu_custom_call.1} parent=55 // pred_fallthru
              _
          $region56: #{tpu_custom_call.1} parent=51 // pred_fallthru
            _
          %340 = vnop
        $region52: #{tpu_custom_call.1} parent=47 // pred_fallthru
          _
      $region48: #{tpu_custom_call.1} parent=5 // pred_fallthru
        _
      %p341 = scmp.le.s32.totalorder 1, %s18
      %p342 = scmp.lt.s32.totalorder %s18, 4
      %p343 = pnand %p341, %p342
      %p344 = pneg %p343
      // Predicated region
      $region90: #{tpu_custom_call.1} parent=5 // pred_check
        _
      $region91: #{tpu_custom_call.1} parent=5 // pred_check_branch
        %346 = sbr.rel (%p343) target = $region93
      $region92: #{tpu_custom_call.1} parent=5 // pred_region
        %s347 = ssub.s32 %s18, 1
        %s348 = sand.u32 %s31, 1
        %s349 = sand.u32 %s31, 1
        %s350 = smul.addr %s349, 16
        %s351 = scalar_lea.vmem [#allocation2], %s350
        // Predicated region
        $region94: #{tpu_custom_call.1} parent=92 // pred_check
          %p352 = pneg %p44
        $region95: #{tpu_custom_call.1} parent=92 // pred_check_branch
          %354 = sbr.rel (%p352) target = $region97
        $region96: #{tpu_custom_call.1} parent=92 // pred_region
          _
        $region97: #{tpu_custom_call.1} parent=92 // pred_fallthru
          _
        %s355 = sand.u32 %s31, 1
        %s356 = sand.u32 %s31, 1
        %s357 = smul.addr %s356, 16
        %s358 = scalar_lea.vmem [#allocation2], %s357
        %p359 = pneg %p44
        %p360 = pneg %p41
        %p361 = pneg %p65
        %p362 = pneg %p62
        %p363 = pneg %p86
        %p364 = pneg %p83
        %p365 = pneg %p107
        %p366 = pneg %p104
        %p367 = pneg %p128
        %p368 = pneg %p125
        %p369 = pneg %p149
        %p370 = pneg %p146
        %p371 = pneg %p170
        %p372 = pneg %p167
        %p373 = pneg %p191
        %p374 = pneg %p188
        %p375 = pneg %p212
        %p376 = pneg %p209
        %p377 = pneg %p238
        %p378 = pneg %p235
        %s379 = sand.u32 %s225, 1
        %s380 = scalar_lea.sflag [#allocation4], %s379
        %s381 = sand.u32 %s225, 1
        %s382 = smul.addr %s381, 16
        %s383 = scalar_lea.vmem [#allocation3], %s382
        %v385 = vld [vmem:[%s1] sm:$0xf]
        %v386 = vld [vmem:[%s1 + $0x4] sm:$0xf]
        %v387 = vld [vmem:[%s2] sm:$0xff]
        %v388 = vld [vmem:[%s2 + $0x8] sm:$0xff]
        %v389 = vld [vmem:[%s3] sm:$0xf]
        %v390 = vld [vmem:[%s4] sm:$0xff]
        %v391 = vld [vmem:[%s5] sm:$0xf]
        %v392 = vld [vmem:[%s5 + $0x4] sm:$0xf]
        %v393 = vld [vmem:[%s6] sm:$0xff]
        %v394 = vld [vmem:[%s6 + $0x8] sm:$0xff]
        %v395 = vld [vmem:[%s7] sm:$0xf]
        %v396 = vld [vmem:[%s7 + $0x4] sm:$0xf]
        %v397 = vld [vmem:[%s7 + $0x8] sm:$0xf]
        %v398 = vld [vmem:[%s7 + $0xc] sm:$0xf]
        %v399 = vld [vmem:[%s8] sm:$0xff]
        %v400 = vld [vmem:[%s8 + $0x8] sm:$0xff]
        %v401 = vld [vmem:[%s8 + $0x10] sm:$0xff]
        %v402 = vld [vmem:[%s8 + $0x18] sm:$0xff]
        %v403 = vld [vmem:[%s351] sm:$0xf]
        %v404 = vld [vmem:[%s351 + $0x4] sm:$0xf]
        %v405 = vld [vmem:[%s351 + $0x8] sm:$0xf]
        %v406 = vld [vmem:[%s351 + $0xc] sm:$0xf]
        %408 = vset.pattern.permute.xlu0 0
        %409 = vperm.xlu0 %408, %v387
        %v410 = vpop.permute.xlu0 %409
        %413 = vset.pattern.permute.xlu0 0
        %414 = vperm.xlu0 %413, %v388
        %v415 = vpop.permute.xlu0 %414
        %v419 = vunpack.c.l.b16 %v385
        %v420 = vunpack.c.l.b16 %v386
        %v421 = vpack.c.b16 %v420, %v419
        %v426 = vunpack.c.l.b16 %v403
        %v427 = vunpack.c.l.b16 %v404
        %v428 = vunpack.c.l.b16 %v405
        %v429 = vunpack.c.l.b16 %v406
        %v430 = vpack.c.b16 %v427, %v426
        %v431 = vpack.c.b16 %v429, %v428
        %vm434 = vcmask 261120
        %v436 = vsel %vm434, %v421, 0
        %438 = vmatprep.subr.bf16.mxu0 0
        %439 = vmatpush1.bf16.msra.mxu0 %v430
        %440 = vmatprep.subr.bf16.mxu0 0
        %441 = vmatpush1.bf16.msra.mxu0 %v431
        %442 = vmatprep.subr.bf16.mxu0 0
        %443 = vmatpush1.bf16.msra.mxu0 0
        %444 = vmatprep.subr.bf16.mxu0 0
        %445 = vmatpush1.bf16.msra.mxu0 0
        %446 = vmatprep.subr.bf16.mxu0 0
        %447 = vmatpush1.bf16.msra.mxu0 0
        %448 = vmatprep.subr.bf16.mxu0 0
        %449 = vmatpush1.bf16.msra.mxu0 0
        %450 = vmatprep.subr.bf16.mxu0 0
        %451 = vmatpush1.bf16.msra.mxu0 0
        %452 = vmatprep.subr.bf16.mxu0 0
        %453 = vmatpush1.bf16.msra.mxu0 0
        %454 = vmatprep.subr.bf16.mxu0 0
        %455 = vmatpush1.bf16.msra.mxu0 0
        %456 = vmatprep.subr.bf16.mxu0 0
        %457 = vmatpush1.bf16.msra.mxu0 0
        %458 = vmatprep.subr.bf16.mxu0 0
        %459 = vmatpush1.bf16.msra.mxu0 0
        %460 = vmatprep.subr.bf16.mxu0 0
        %461 = vmatpush1.bf16.msra.mxu0 0
        %462 = vmatprep.subr.bf16.mxu0 0
        %463 = vmatpush1.bf16.msra.mxu0 0
        %464 = vmatprep.subr.bf16.mxu0 0
        %465 = vmatpush1.bf16.msra.mxu0 0
        %466 = vmatprep.subr.bf16.mxu0 0
        %467 = vmatpush1.bf16.msra.mxu0 0
        %468 = vmatprep.subr.bf16.mxu0 0
        %469 = vmatpush1.bf16.msra.mxu0 0
        %470 = vmatprep.mubr.bf16.mxu0 0
        %471 = vmatmul.mubr.bf16.gmra.mrb[0].mxu0 %v436
        %v472 = vpop.f32.mrb[0].mxu0
        %v473 = vadd.f32 %v410, %v472
        %v474 = vpop.f32.mrb[0].mxu0
        %v475 = vpop.f32.mrb[0].mxu0
        %v476 = vadd.f32 %v415, %v475
        %v477 = vpop.f32.mrb[0].mxu0
        %478 = vdwg.mxu0
        %v479 = vsub.f32 0.0, %v473
        %v480 = vsub.f32 0.0, %v476
        %v481 = vmul.f32 %v479, 1.442695
        %v482 = vpow.pop %v481
        %v483 = vmul.f32 %v480, 1.442695
        %v484 = vpow.pop %v483
        %v485 = vadd.f32 %v482, 1.0
        %v486 = vadd.f32 %v484, 1.0
        %v487 = vrcp.pop %v485
        %v488 = vrcp.pop %v486
        %v489 = vpack.c.bf16 %v488, %v487
        %491 = vset.pattern.permute.xlu0 0
        %492 = vperm.xlu0 %491, %v390
        %v493 = vpop.permute.xlu0 %492
        %vm495 = vcmask 130048
        %v497 = vsel %vm495, %v389, 0
        %499 = vmatprep.subr.bf16.mxu0 0
        %500 = vmatpush1.bf16.msra.mxu0 %v489
        %501 = vmatprep.subr.bf16.mxu0 0
        %502 = vmatpush1.bf16.msra.mxu0 0
        %503 = vmatprep.subr.bf16.mxu0 0
        %504 = vmatpush1.bf16.msra.mxu0 0
        %505 = vmatprep.subr.bf16.mxu0 0
        %506 = vmatpush1.bf16.msra.mxu0 0
        %507 = vmatprep.subr.bf16.mxu0 0
        %508 = vmatpush1.bf16.msra.mxu0 0
        %509 = vmatprep.subr.bf16.mxu0 0
        %510 = vmatpush1.bf16.msra.mxu0 0
        %511 = vmatprep.subr.bf16.mxu0 0
        %512 = vmatpush1.bf16.msra.mxu0 0
        %513 = vmatprep.subr.bf16.mxu0 0
        %514 = vmatpush1.bf16.msra.mxu0 0
        %515 = vmatprep.subr.bf16.mxu0 0
        %516 = vmatpush1.bf16.msra.mxu0 0
        %517 = vmatprep.subr.bf16.mxu0 0
        %518 = vmatpush1.bf16.msra.mxu0 0
        %519 = vmatprep.subr.bf16.mxu0 0
        %520 = vmatpush1.bf16.msra.mxu0 0
        %521 = vmatprep.subr.bf16.mxu0 0
        %522 = vmatpush1.bf16.msra.mxu0 0
        %523 = vmatprep.subr.bf16.mxu0 0
        %524 = vmatpush1.bf16.msra.mxu0 0
        %525 = vmatprep.subr.bf16.mxu0 0
        %526 = vmatpush1.bf16.msra.mxu0 0
        %527 = vmatprep.subr.bf16.mxu0 0
        %528 = vmatpush1.bf16.msra.mxu0 0
        %529 = vmatprep.subr.bf16.mxu0 0
        %530 = vmatpush1.bf16.msra.mxu0 0
        %531 = vmatprep.mubr.bf16.mxu0 0
        %532 = vmatmul.mubr.bf16.gmra.mrb[0].mxu0 %v497
        %v533 = vpop.f32.mrb[0].mxu0
        %v534 = vadd.f32 %v493, %v533
        %v535 = vpop.f32.mrb[0].mxu0
        %v536 = vpop.f32.mrb[0].mxu0
        %v537 = vpop.f32.mrb[0].mxu0
        %538 = vdwg.mxu0
        %v539 = vsub.f32 0.0, %v534
        %v540 = vmul.f32 %v539, 1.442695
        %v541 = vpow.pop %v540
        %v542 = vadd.f32 %v541, 1.0
        %v543 = vrcp.pop %v542
        %v544 = vpack.c.bf16 %v543, %v543
        %546 = vset.pattern.permute.xlu0 0
        %547 = vperm.xlu0 %546, %v393
        %v548 = vpop.permute.xlu0 %547
        %551 = vset.pattern.permute.xlu0 0
        %552 = vperm.xlu0 %551, %v394
        %v553 = vpop.permute.xlu0 %552
        %v557 = vunpack.c.l.b16 %v391
        %v558 = vunpack.c.l.b16 %v392
        %v559 = vpack.c.b16 %v558, %v557
        %vm560 = vcmask 64512
        %v562 = vsel %vm560, %v559, 0
        %vm564 = vcmask 1043456
        %v566 = vsel %vm564, %v544, 0
        %568 = vmatprep.subr.bf16.mxu0 0
        %569 = vmatpush1.bf16.msra.mxu0 %v566
        %570 = vmatprep.subr.bf16.mxu0 0
        %571 = vmatpush1.bf16.msra.mxu0 0
        %572 = vmatprep.subr.bf16.mxu0 0
        %573 = vmatpush1.bf16.msra.mxu0 0
        %574 = vmatprep.subr.bf16.mxu0 0
        %575 = vmatpush1.bf16.msra.mxu0 0
        %576 = vmatprep.subr.bf16.mxu0 0
        %577 = vmatpush1.bf16.msra.mxu0 0
        %578 = vmatprep.subr.bf16.mxu0 0
        %579 = vmatpush1.bf16.msra.mxu0 0
        %580 = vmatprep.subr.bf16.mxu0 0
        %581 = vmatpush1.bf16.msra.mxu0 0
        %582 = vmatprep.subr.bf16.mxu0 0
        %583 = vmatpush1.bf16.msra.mxu0 0
        %584 = vmatprep.subr.bf16.mxu0 0
        %585 = vmatpush1.bf16.msra.mxu0 0
        %586 = vmatprep.subr.bf16.mxu0 0
        %587 = vmatpush1.bf16.msra.mxu0 0
        %588 = vmatprep.subr.bf16.mxu0 0
        %589 = vmatpush1.bf16.msra.mxu0 0
        %590 = vmatprep.subr.bf16.mxu0 0
        %591 = vmatpush1.bf16.msra.mxu0 0
        %592 = vmatprep.subr.bf16.mxu0 0
        %593 = vmatpush1.bf16.msra.mxu0 0
        %594 = vmatprep.subr.bf16.mxu0 0
        %595 = vmatpush1.bf16.msra.mxu0 0
        %596 = vmatprep.subr.bf16.mxu0 0
        %597 = vmatpush1.bf16.msra.mxu0 0
        %598 = vmatprep.subr.bf16.mxu0 0
        %599 = vmatpush1.bf16.msra.mxu0 0
        %600 = vmatprep.mubr.bf16.mxu0 0
        %601 = vmatmul.mubr.bf16.gmra.mrb[0].mxu0 %v562
        %v602 = vpop.f32.mrb[0].mxu0
        %v603 = vadd.f32 %v548, %v602
        %v604 = vpop.f32.mrb[0].mxu0
        %v605 = vpop.f32.mrb[0].mxu0
        %v606 = vadd.f32 %v553, %v605
        %v607 = vpop.f32.mrb[0].mxu0
        %608 = vdwg.mxu0
        %v609 = vsub.f32 0.0, %v603
        %v610 = vsub.f32 0.0, %v606
        %v611 = vmul.f32 %v609, 1.442695
        %v612 = vpow.pop %v611
        %v613 = vmul.f32 %v610, 1.442695
        %v614 = vpow.pop %v613
        %v615 = vadd.f32 %v612, 1.0
        %v616 = vadd.f32 %v614, 1.0
        %v617 = vrcp.pop %v615
        %v618 = vrcp.pop %v616
        %v619 = vpack.c.bf16 %v618, %v617
        %621 = vset.pattern.permute.xlu0 0
        %622 = vperm.xlu0 %621, %v399
        %v623 = vpop.permute.xlu0 %622
        %626 = vset.pattern.permute.xlu0 0
        %627 = vperm.xlu0 %626, %v400
        %v628 = vpop.permute.xlu0 %627
        %631 = vset.pattern.permute.xlu0 0
        %632 = vperm.xlu0 %631, %v401
        %v633 = vpop.permute.xlu0 %632
        %636 = vset.pattern.permute.xlu0 0
        %637 = vperm.xlu0 %636, %v402
        %v638 = vpop.permute.xlu0 %637
        %v644 = vunpack.c.l.b16 %v395
        %v645 = vunpack.c.l.b16 %v396
        %v646 = vunpack.c.l.b16 %v397
        %v647 = vunpack.c.l.b16 %v398
        %v648 = vpack.c.b16 %v645, %v644
        %v649 = vpack.c.b16 %v647, %v646
        %v651 = vsel %vm495, %v648, 0
        %v654 = vsel %vm495, %v649, 0
        %656 = vmatprep.subr.bf16.mxu0 0
        %657 = vmatpush1.bf16.msra.mxu0 %v619
        %658 = vmatprep.subr.bf16.mxu0 0
        %659 = vmatpush1.bf16.msra.mxu0 0
        %660 = vmatprep.subr.bf16.mxu0 0
        %661 = vmatpush1.bf16.msra.mxu0 0
        %662 = vmatprep.subr.bf16.mxu0 0
        %663 = vmatpush1.bf16.msra.mxu0 0
        %664 = vmatprep.subr.bf16.mxu0 0
        %665 = vmatpush1.bf16.msra.mxu0 0
        %666 = vmatprep.subr.bf16.mxu0 0
        %667 = vmatpush1.bf16.msra.mxu0 0
        %668 = vmatprep.subr.bf16.mxu0 0
        %669 = vmatpush1.bf16.msra.mxu0 0
        %670 = vmatprep.subr.bf16.mxu0 0
        %671 = vmatpush1.bf16.msra.mxu0 0
        %672 = vmatprep.subr.bf16.mxu0 0
        %673 = vmatpush1.bf16.msra.mxu0 0
        %674 = vmatprep.subr.bf16.mxu0 0
        %675 = vmatpush1.bf16.msra.mxu0 0
        %676 = vmatprep.subr.bf16.mxu0 0
        %677 = vmatpush1.bf16.msra.mxu0 0
        %678 = vmatprep.subr.bf16.mxu0 0
        %679 = vmatpush1.bf16.msra.mxu0 0
        %680 = vmatprep.subr.bf16.mxu0 0
        %681 = vmatpush1.bf16.msra.mxu0 0
        %682 = vmatprep.subr.bf16.mxu0 0
        %683 = vmatpush1.bf16.msra.mxu0 0
        %684 = vmatprep.subr.bf16.mxu0 0
        %685 = vmatpush1.bf16.msra.mxu0 0
        %686 = vmatprep.subr.bf16.mxu0 0
        %687 = vmatpush1.bf16.msra.mxu0 0
        %688 = vmatprep.mubr.bf16.mxu0 0
        %689 = vmatmul.mubr.bf16.gmra.mrb[0].mxu0 %v651
        %v690 = vpop.f32.mrb[0].mxu0
        %v691 = vadd.f32 %v623, %v690
        %v692 = vpop.f32.mrb[0].mxu0
        %v693 = vpop.f32.mrb[0].mxu0
        %v694 = vadd.f32 %v628, %v693
        %v695 = vpop.f32.mrb[0].mxu0
        %696 = vmatprep.mubr.bf16.mxu0 0
        %697 = vmatmul.mubr.bf16.gmra.mrb[0].mxu0 %v654
        %v698 = vpop.f32.mrb[0].mxu0
        %v699 = vadd.f32 %v633, %v698
        %v700 = vpop.f32.mrb[0].mxu0
        %v701 = vpop.f32.mrb[0].mxu0
        %v702 = vadd.f32 %v638, %v701
        %v703 = vpop.f32.mrb[0].mxu0
        %704 = vdwg.mxu0
        %v705 = vsub.f32 0.0, %v691
        %v706 = vsub.f32 0.0, %v694
        %v707 = vsub.f32 0.0, %v699
        %v708 = vsub.f32 0.0, %v702
        %v709 = vmul.f32 %v705, 1.442695
        %v710 = vpow.pop %v709
        %v711 = vmul.f32 %v706, 1.442695
        %v712 = vpow.pop %v711
        %v713 = vmul.f32 %v707, 1.442695
        %v714 = vpow.pop %v713
        %v715 = vmul.f32 %v708, 1.442695
        %v716 = vpow.pop %v715
        %v717 = vadd.f32 %v710, 1.0
        %v718 = vadd.f32 %v712, 1.0
        %v719 = vadd.f32 %v714, 1.0
        %v720 = vadd.f32 %v716, 1.0
        %v721 = vrcp.pop %v717
        %v722 = vrcp.pop %v718
        %v723 = vrcp.pop %v719
        %v724 = vrcp.pop %v720
        %v725 = vpack.c.bf16 %v722, %v721
        %v726 = vpack.c.bf16 %v724, %v723
        %v729 = vunpack.c.l.b16 %v725
        %v730 = vunpack.c.h.b16 %v725
        %v731 = vunpack.c.l.b16 %v726
        %v732 = vunpack.c.h.b16 %v726
        %v733 = vpack.c.b16 %v729, %v729
        %v734 = vpack.c.b16 %v730, %v730
        %v735 = vpack.c.b16 %v731, %v731
        %v736 = vpack.c.b16 %v732, %v732
        %741 = vst [vmem:[%s383] sm:$0xf] %v733
        %742 = vst [vmem:[%s383 + $0x4] sm:$0xf] %v734
        %743 = vst [vmem:[%s383 + $0x8] sm:$0xf] %v735
        %744 = vst [vmem:[%s383 + $0xc] sm:$0xf] %v736
        %s745 = sand.u32 %s225, 1
        %s746 = scalar_lea.sflag [#allocation4], %s745
        %s747 = sand.u32 %s225, 1
        %s748 = smul.addr %s747, 16
        %s749 = scalar_lea.vmem [#allocation3], %s748
        // Predicated region
        $region98: #{tpu_custom_call.1} parent=92 // pred_check
          %p750 = pneg %p235
        $region99: #{tpu_custom_call.1} parent=92 // pred_check_branch
          %752 = sbr.rel (%p750) target = $region101
        $region100: #{tpu_custom_call.1} parent=92 // pred_region
          %s754 = ssub.s32 256, 256
          %755 = vsyncadd %s746, %s754
          %s756 = smul.addr %s23, 64
          %s757 = scalar_lea.hbm %s9, %s756
          %s758 = sshll.u32 %s749, 4
          %s759 = int_to_ptr.vmem [resolvable:$true] %s758
          %764 = dma.vmem_to_hbm [thread:$0]  %s759, 256, %s757, %s746, 64, 192, 4
        $region101: #{tpu_custom_call.1} parent=92 // pred_fallthru
          _
      $region93: #{tpu_custom_call.1} parent=5 // pred_fallthru
        _
      %p765 = scmp.le.s32.totalorder 2, %s18
      // Predicated region
      $region102: #{tpu_custom_call.1} parent=5 // pred_check
        %p766 = pneg %p765
      $region103: #{tpu_custom_call.1} parent=5 // pred_check_branch
        %768 = sbr.rel (%p766) target = $region105
      $region104: #{tpu_custom_call.1} parent=5 // pred_region
        %s769 = ssub.s32 %s18, 2
        // Predicated region
        $region106: #{tpu_custom_call.1} parent=104 // pred_check
          %p770 = pneg %p241
        $region107: #{tpu_custom_call.1} parent=104 // pred_check_branch
          %772 = sbr.rel (%p770) target = $region109
        $region108: #{tpu_custom_call.1} parent=104 // pred_region
          %s773 = sand.u32 %s226, 1
          %s774 = scalar_lea.sflag [#allocation4], %s773
          %s775 = sand.u32 %s226, 1
          %s776 = smul.addr %s775, 16
          %s777 = scalar_lea.vmem [#allocation3], %s776
          %778 = dma.done %s774, 256
        $region109: #{tpu_custom_call.1} parent=104 // pred_fallthru
          _
      $region105: #{tpu_custom_call.1} parent=5 // pred_fallthru
        _
    $region6: #{tpu_custom_call.1} parent=1 // loop_footer
      %s22 = sadd.s32 1, %s18
    $region7: #{tpu_custom_call.1} parent=1 // loop_footer_branch
      %17 = sbr.rel target = $region3
    $region8: #{tpu_custom_call.1} parent=1 // loop_exit
      _
    %779 = vsyncpa [#allocation4], 1
    %s780 = scalar_lea.sflag [#allocation4], 1
    %781 = vsyncpa %s780, 1

// kernel: tpu_custom_call.1
$region0: #{tpu_custom_call.1}
  #allocation0 [shape = 'u32[]', space=smem, size = 0x4, offset = 0x4, fixed_abs, tag = 'smem constant byte address 0x4 - core index']
  #allocation1 [shape = 'u32[144,128]{1,0:T(1,128)}', space=vmem, size = 0x12000, scoped, tag = 'internal scratch']
  %s0 = inlined_call_operand.vmem [shape: bf16[32,300], index: 0, kind: input, shape index: {}]
  %s1 = inlined_call_operand.vmem [shape: bf16[16,32], index: 1, kind: input, shape index: {}]
  %s2 = inlined_call_operand.vmem [shape: f32[16,1], index: 2, kind: input, shape index: {}]
  %s3 = inlined_call_operand.vmem [shape: bf16[8,16], index: 3, kind: input, shape index: {}]
  %s4 = inlined_call_operand.vmem [shape: f32[8,1], index: 4, kind: input, shape index: {}]
  %s5 = inlined_call_operand.vmem [shape: bf16[16,8], index: 5, kind: input, shape index: {}]
  %s6 = inlined_call_operand.vmem [shape: f32[16,1], index: 6, kind: input, shape index: {}]
  %s7 = inlined_call_operand.vmem [shape: bf16[32,16], index: 7, kind: input, shape index: {}]
  %s8 = inlined_call_operand.vmem [shape: f32[32,1], index: 8, kind: input, shape index: {}]
  %s9 = inlined_call_operand.hbm [shape: bf16[32,300], index: 9, kind: output, shape index: {}]
  %s10 = sld [smem:[#allocation0]]
  $region110: #{tpu_custom_call.1} parent=0
    _
  %s12 = ssub.s32 1, %s10
  %s13 = scalar_select 0, %s12, %s10
  $region1: #{tpu_custom_call.1} parent=0
    #allocation2 [shape = 'u8[16384]{0}', space=vmem, size = 0x4000, scoped, tag = 'input window, operand 0']
    #allocation3 [shape = 'u8[16384]{0}', space=vmem, size = 0x4000, scoped, tag = 'output window, operand 0']
    #allocation4 [shape = 's32[2]{0}', space=sflag, size = 0x8, scoped, tag = 'scoped memory for tpu_custom_call.1']
    %14 = vsyncpa [#allocation4], 0
    %s15 = scalar_lea.sflag [#allocation4], 1
    %16 = vsyncpa %s15, 0
    loop: start=0, step=1, limit=5
    $region2: #{tpu_custom_call.1} parent=1 // loop_pre_header
      _
    $region3: #{tpu_custom_call.1} parent=1 // loop_header
      %s18 = sphi 0, %s22
      %p19 = scmp.ge.s32.totalorder %s18, 5
      %s28 = sphi 0, %s30
      %s31 = sphi 0, %s28
      %s32 = sphi 0, %s31
      %s48 = sphi 0, %s32
      %s52 = sphi 0, %s52
      %s54 = sphi 0, %s52
      %s55 = sphi 0, %s54
      %s69 = sphi 0, %s55
      %s73 = sphi 0, %s73
      %s75 = sphi 0, %s73
      %s76 = sphi 0, %s75
      %s90 = sphi 0, %s76
      %s94 = sphi 0, %s94
      %s96 = sphi 0, %s94
      %s97 = sphi 0, %s96
      %s111 = sphi 0, %s97
      %s115 = sphi 0, %s115
      %s117 = sphi 0, %s115
      %s118 = sphi 0, %s117
      %s132 = sphi 0, %s118
      %s136 = sphi 0, %s136
      %s138 = sphi 0, %s136
      %s139 = sphi 0, %s138
      %s153 = sphi 0, %s139
      %s157 = sphi 0, %s157
      %s159 = sphi 0, %s157
      %s160 = sphi 0, %s159
      %s174 = sphi 0, %s160
      %s178 = sphi 0, %s178
      %s180 = sphi 0, %s178
      %s181 = sphi 0, %s180
      %s195 = sphi 0, %s181
      %s199 = sphi 0, %s199
      %s201 = sphi 0, %s199
      %s202 = sphi 0, %s201
      %s216 = sphi 0, %s202
      %s222 = sphi 0, %s224
      %s225 = sphi 0, %s222
      %s226 = sphi 0, %s225
      %s242 = sphi 0, %s226
    $region4: #{tpu_custom_call.1} parent=1 // loop_header_branch
      %21 = sbr.rel (%p19) target = $region8
    $region5: #{tpu_custom_call.1} parent=1 // loop_body
      %s23 = ssub.s32 %s18, 1
      %s24 = ssub.s32 %s18, 2
      %s25 = sadd.s32 %s18, 1
      %s26 = ssub.s32 %s18, %s25
      %p27 = scmp.eq.s32.totalorder %s26, 0
      %s29 = sadd.s32 %s28, 1
      %s30 = scalar_select %p27, %s28, %s29
      %p33 = pneg %p27
      %p34 = scmp.eq.s32.totalorder %s18, 2
      %p35 = por %p33, %p34
      %p36 = scmp.ne.s32.totalorder %s28, %s31
      %p37 = scmp.eq.s32.totalorder %s18, 0
      %p38 = por %p36, %p37
      %p39 = scmp.ne.s32.totalorder %s28, %s31
      %p40 = scmp.eq.s32.totalorder %s23, 2
      %p41 = por %p39, %p40
      %p42 = scmp.ne.s32.totalorder %s31, %s32
      %p43 = scmp.eq.s32.totalorder %s23, 0
      %p44 = por %p42, %p43
      %p45 = scmp.ne.s32.totalorder %s31, %s32
      %p46 = scmp.eq.s32.totalorder %s24, 2
      %p47 = por %p45, %p46
      %p49 = scmp.ne.s32.totalorder %s32, %s48
      %p50 = scmp.eq.s32.totalorder %s24, 0
      %p51 = por %p49, %p50
      %s53 = sadd.s32 %s52, 1
      %p56 = scmp.eq.s32.totalorder %s18, 2
      %p57 = scmp.ne.s32.totalorder %s52, %s54
      %p58 = scmp.eq.s32.totalorder %s18, 0
      %p59 = por %p57, %p58
      %p60 = scmp.ne.s32.totalorder %s52, %s54
      %p61 = scmp.eq.s32.totalorder %s23, 2
      %p62 = por %p60, %p61
      %p63 = scmp.ne.s32.totalorder %s54, %s55
      %p64 = scmp.eq.s32.totalorder %s23, 0
      %p65 = por %p63, %p64
      %p66 = scmp.ne.s32.totalorder %s54, %s55
      %p67 = scmp.eq.s32.totalorder %s24, 2
      %p68 = por %p66, %p67
      %p70 = scmp.ne.s32.totalorder %s55, %s69
      %p71 = scmp.eq.s32.totalorder %s24, 0
      %p72 = por %p70, %p71
      %s74 = sadd.s32 %s73, 1
      %p77 = scmp.eq.s32.totalorder %s18, 2
      %p78 = scmp.ne.s32.totalorder %s73, %s75
      %p79 = scmp.eq.s32.totalorder %s18, 0
      %p80 = por %p78, %p79
      %p81 = scmp.ne.s32.totalorder %s73, %s75
      %p82 = scmp.eq.s32.totalorder %s23, 2
      %p83 = por %p81, %p82
      %p84 = scmp.ne.s32.totalorder %s75, %s76
      %p85 = scmp.eq.s32.totalorder %s23, 0
      %p86 = por %p84, %p85
      %p87 = scmp.ne.s32.totalorder %s75, %s76
      %p88 = scmp.eq.s32.totalorder %s24, 2
      %p89 = por %p87, %p88
      %p91 = scmp.ne.s32.totalorder %s76, %s90
      %p92 = scmp.eq.s32.totalorder %s24, 0
      %p93 = por %p91, %p92
      %s95 = sadd.s32 %s94, 1
      %p98 = scmp.eq.s32.totalorder %s18, 2
      %p99 = scmp.ne.s32.totalorder %s94, %s96
      %p100 = scmp.eq.s32.totalorder %s18, 0
      %p101 = por %p99, %p100
      %p102 = scmp.ne.s32.totalorder %s94, %s96
      %p103 = scmp.eq.s32.totalorder %s23, 2
      %p104 = por %p102, %p103
      %p105 = scmp.ne.s32.totalorder %s96, %s97
      %p106 = scmp.eq.s32.totalorder %s23, 0
      %p107 = por %p105, %p106
      %p108 = scmp.ne.s32.totalorder %s96, %s97
      %p109 = scmp.eq.s32.totalorder %s24, 2
      %p110 = por %p108, %p109
      %p112 = scmp.ne.s32.totalorder %s97, %s111
      %p113 = scmp.eq.s32.totalorder %s24, 0
      %p114 = por %p112, %p113
      %s116 = sadd.s32 %s115, 1
      %p119 = scmp.eq.s32.totalorder %s18, 2
      %p120 = scmp.ne.s32.totalorder %s115, %s117
      %p121 = scmp.eq.s32.totalorder %s18, 0
      %p122 = por %p120, %p121
      %p123 = scmp.ne.s32.totalorder %s115, %s117
      %p124 = scmp.eq.s32.totalorder %s23, 2
      %p125 = por %p123, %p124
      %p126 = scmp.ne.s32.totalorder %s117, %s118
      %p127 = scmp.eq.s32.totalorder %s23, 0
      %p128 = por %p126, %p127
      %p129 = scmp.ne.s32.totalorder %s117, %s118
      %p130 = scmp.eq.s32.totalorder %s24, 2
      %p131 = por %p129, %p130
      %p133 = scmp.ne.s32.totalorder %s118, %s132
      %p134 = scmp.eq.s32.totalorder %s24, 0
      %p135 = por %p133, %p134
      %s137 = sadd.s32 %s136, 1
      %p140 = scmp.eq.s32.totalorder %s18, 2
      %p141 = scmp.ne.s32.totalorder %s136, %s138
      %p142 = scmp.eq.s32.totalorder %s18, 0
      %p143 = por %p141, %p142
      %p144 = scmp.ne.s32.totalorder %s136, %s138
      %p145 = scmp.eq.s32.totalorder %s23, 2
      %p146 = por %p144, %p145
      %p147 = scmp.ne.s32.totalorder %s138, %s139
      %p148 = scmp.eq.s32.totalorder %s23, 0
      %p149 = por %p147, %p148
      %p150 = scmp.ne.s32.totalorder %s138, %s139
      %p151 = scmp.eq.s32.totalorder %s24, 2
      %p152 = por %p150, %p151
      %p154 = scmp.ne.s32.totalorder %s139, %s153
      %p155 = scmp.eq.s32.totalorder %s24, 0
      %p156 = por %p154, %p155
      %s158 = sadd.s32 %s157, 1
      %p161 = scmp.eq.s32.totalorder %s18, 2
      %p162 = scmp.ne.s32.totalorder %s157, %s159
      %p163 = scmp.eq.s32.totalorder %s18, 0
      %p164 = por %p162, %p163
      %p165 = scmp.ne.s32.totalorder %s157, %s159
      %p166 = scmp.eq.s32.totalorder %s23, 2
      %p167 = por %p165, %p166
      %p168 = scmp.ne.s32.totalorder %s159, %s160
      %p169 = scmp.eq.s32.totalorder %s23, 0
      %p170 = por %p168, %p169
      %p171 = scmp.ne.s32.totalorder %s159, %s160
      %p172 = scmp.eq.s32.totalorder %s24, 2
      %p173 = por %p171, %p172
      %p175 = scmp.ne.s32.totalorder %s160, %s174
      %p176 = scmp.eq.s32.totalorder %s24, 0
      %p177 = por %p175, %p176
      %s179 = sadd.s32 %s178, 1
      %p182 = scmp.eq.s32.totalorder %s18, 2
      %p183 = scmp.ne.s32.totalorder %s178, %s180
      %p184 = scmp.eq.s32.totalorder %s18, 0
      %p185 = por %p183, %p184
      %p186 = scmp.ne.s32.totalorder %s178, %s180
      %p187 = scmp.eq.s32.totalorder %s23, 2
      %p188 = por %p186, %p187
      %p189 = scmp.ne.s32.totalorder %s180, %s181
      %p190 = scmp.eq.s32.totalorder %s23, 0
      %p191 = por %p189, %p190
      %p192 = scmp.ne.s32.totalorder %s180, %s181
      %p193 = scmp.eq.s32.totalorder %s24, 2
      %p194 = por %p192, %p193
      %p196 = scmp.ne.s32.totalorder %s181, %s195
      %p197 = scmp.eq.s32.totalorder %s24, 0
      %p198 = por %p196, %p197
      %s200 = sadd.s32 %s199, 1
      %p203 = scmp.eq.s32.totalorder %s18, 2
      %p204 = scmp.ne.s32.totalorder %s199, %s201
      %p205 = scmp.eq.s32.totalorder %s18, 0
      %p206 = por %p204, %p205
      %p207 = scmp.ne.s32.totalorder %s199, %s201
      %p208 = scmp.eq.s32.totalorder %s23, 2
      %p209 = por %p207, %p208
      %p210 = scmp.ne.s32.totalorder %s201, %s202
      %p211 = scmp.eq.s32.totalorder %s23, 0
      %p212 = por %p210, %p211
      %p213 = scmp.ne.s32.totalorder %s201, %s202
      %p214 = scmp.eq.s32.totalorder %s24, 2
      %p215 = por %p213, %p214
      %p217 = scmp.ne.s32.totalorder %s202, %s216
      %p218 = scmp.eq.s32.totalorder %s24, 0
      %p219 = por %p217, %p218
      %s220 = ssub.s32 %s18, %s25
      %p221 = scmp.eq.s32.totalorder %s220, 0
      %s223 = sadd.s32 %s222, 1
      %s224 = scalar_select %p221, %s222, %s223
      %p227 = pneg %p221
      %p228 = scmp.eq.s32.totalorder %s18, 2
      %p229 = por %p227, %p228
      %p230 = scmp.ne.s32.totalorder %s222, %s225
      %p231 = scmp.eq.s32.totalorder %s18, 0
      %p232 = por %p230, %p231
      %p233 = scmp.ne.s32.totalorder %s222, %s225
      %p234 = scmp.eq.s32.totalorder %s23, 2
      %p235 = por %p233, %p234
      %p236 = scmp.ne.s32.totalorder %s225, %s226
      %p237 = scmp.eq.s32.totalorder %s23, 0
      %p238 = por %p236, %p237
      %p239 = scmp.ne.s32.totalorder %s225, %s226
      %p240 = scmp.eq.s32.totalorder %s24, 2
      %p241 = por %p239, %p240
      %p243 = scmp.ne.s32.totalorder %s226, %s242
      %p244 = scmp.eq.s32.totalorder %s24, 0
      %p245 = por %p243, %p244
      %p246 = scmp.le.s32.totalorder 1, %s18
      %p247 = scmp.lt.s32.totalorder %s18, 4
      %p248 = pnand %p246, %p247
      %p249 = pneg %p248
      // Predicated region
      $region9: #{tpu_custom_call.1} parent=5 // pred_check
        _
      $region10: #{tpu_custom_call.1} parent=5 // pred_check_branch
        %251 = sbr.rel (%p248) target = $region12
      $region11: #{tpu_custom_call.1} parent=5 // pred_region
        %s252 = ssub.s32 %s18, 1
        // Predicated region
        $region13: #{tpu_custom_call.1} parent=11 // pred_check
          %p253 = pneg %p65
        $region14: #{tpu_custom_call.1} parent=11 // pred_check_branch
          %255 = sbr.rel (%p253) target = $region16
        $region15: #{tpu_custom_call.1} parent=11 // pred_region
          _
        $region16: #{tpu_custom_call.1} parent=11 // pred_fallthru
          _
        // Predicated region
        $region17: #{tpu_custom_call.1} parent=11 // pred_check
          %p256 = pneg %p86
        $region18: #{tpu_custom_call.1} parent=11 // pred_check_branch
          %258 = sbr.rel (%p256) target = $region20
        $region19: #{tpu_custom_call.1} parent=11 // pred_region
          _
        $region20: #{tpu_custom_call.1} parent=11 // pred_fallthru
          _
        // Predicated region
        $region21: #{tpu_custom_call.1} parent=11 // pred_check
          %p259 = pneg %p107
        $region22: #{tpu_custom_call.1} parent=11 // pred_check_branch
          %261 = sbr.rel (%p259) target = $region24
        $region23: #{tpu_custom_call.1} parent=11 // pred_region
          _
        $region24: #{tpu_custom_call.1} parent=11 // pred_fallthru
          _
        // Predicated region
        $region25: #{tpu_custom_call.1} parent=11 // pred_check
          %p262 = pneg %p128
        $region26: #{tpu_custom_call.1} parent=11 // pred_check_branch
          %264 = sbr.rel (%p262) target = $region28
        $region27: #{tpu_custom_call.1} parent=11 // pred_region
          _
        $region28: #{tpu_custom_call.1} parent=11 // pred_fallthru
          _
        // Predicated region
        $region29: #{tpu_custom_call.1} parent=11 // pred_check
          %p265 = pneg %p149
        $region30: #{tpu_custom_call.1} parent=11 // pred_check_branch
          %267 = sbr.rel (%p265) target = $region32
        $region31: #{tpu_custom_call.1} parent=11 // pred_region
          _
        $region32: #{tpu_custom_call.1} parent=11 // pred_fallthru
          _
        // Predicated region
        $region33: #{tpu_custom_call.1} parent=11 // pred_check
          %p268 = pneg %p170
        $region34: #{tpu_custom_call.1} parent=11 // pred_check_branch
          %270 = sbr.rel (%p268) target = $region36
        $region35: #{tpu_custom_call.1} parent=11 // pred_region
          _
        $region36: #{tpu_custom_call.1} parent=11 // pred_fallthru
          _
        // Predicated region
        $region37: #{tpu_custom_call.1} parent=11 // pred_check
          %p271 = pneg %p191
        $region38: #{tpu_custom_call.1} parent=11 // pred_check_branch
          %273 = sbr.rel (%p271) target = $region40
        $region39: #{tpu_custom_call.1} parent=11 // pred_region
          _
        $region40: #{tpu_custom_call.1} parent=11 // pred_fallthru
          _
        // Predicated region
        $region41: #{tpu_custom_call.1} parent=11 // pred_check
          %p274 = pneg %p212
        $region42: #{tpu_custom_call.1} parent=11 // pred_check_branch
          %276 = sbr.rel (%p274) target = $region44
        $region43: #{tpu_custom_call.1} parent=11 // pred_region
          _
        $region44: #{tpu_custom_call.1} parent=11 // pred_fallthru
          _
      $region12: #{tpu_custom_call.1} parent=5 // pred_fallthru
        _
      %p277 = scmp.lt.s32.totalorder %s18, 3
      // Predicated region
      $region45: #{tpu_custom_call.1} parent=5 // pred_check
        %p278 = pneg %p277
      $region46: #{tpu_custom_call.1} parent=5 // pred_check_branch
        %280 = sbr.rel (%p278) target = $region48
      $region47: #{tpu_custom_call.1} parent=5 // pred_region
        // Predicated region
        $region49: #{tpu_custom_call.1} parent=47 // pred_check
          %p281 = pneg %p38
        $region50: #{tpu_custom_call.1} parent=47 // pred_check_branch
          %283 = sbr.rel (%p281) target = $region52
        $region51: #{tpu_custom_call.1} parent=47 // pred_region
          %s284 = sand.u32 %s28, 1
          %s285 = sand.u32 %s28, 1
          %s286 = smul.addr %s285, 16
          %s287 = scalar_lea.vmem [#allocation2], %s286
          %s288 = smul.addr %s18, 4
          %s289 = scalar_lea.vmem %s0, %s288
          // Predicated region
          $region53: #{tpu_custom_call.1} parent=51 // pred_check
            _
          $region54: #{tpu_custom_call.1} parent=51 // pred_check_branch
            %291 = sbr.rel (0) target = $region56
          $region55: #{tpu_custom_call.1} parent=51 // pred_region
            // Predicated region
            $region57: #{tpu_custom_call.1} parent=55 // pred_check
              _
            $region58: #{tpu_custom_call.1} parent=55 // pred_check_branch
              %293 = sbr.rel target = $region60
            $region59: #{tpu_custom_call.1} parent=55 // pred_region
              // Predicated region
              $region72: #{tpu_custom_call.1} parent=59 // pred_check
                _
              $region73: #{tpu_custom_call.1} parent=59 // pred_check_branch
                %314 = sbr.rel (0) target = $region75
              $region74: #{tpu_custom_call.1} parent=59 // pred_region
                loop: start=0, step=1, limit=1
                $region76: #{tpu_custom_call.1} parent=74 // loop_pre_header
                  _
                $region77: #{tpu_custom_call.1} parent=74 // loop_header
                  %s316 = sphi 0, %s320
                  %p317 = scmp.ge.s32.totalorder %s316, 1
                  %s321 = sphi %s289, %s289
                  %s322 = sphi %s287, %s287
                $region78: #{tpu_custom_call.1} parent=74 // loop_header_branch
                  %319 = sbr.rel (%p317) target = $region82
                $region79: #{tpu_custom_call.1} parent=74 // loop_body
                  _
                $region80: #{tpu_custom_call.1} parent=74 // loop_footer
                  %s320 = sadd.s32 1, %s316
                $region81: #{tpu_custom_call.1} parent=74 // loop_footer_branch
                  %315 = sbr.rel target = $region77
                $region82: #{tpu_custom_call.1} parent=74 // loop_exit
                  _
                loop: start=0, step=1, limit=1
                $region83: #{tpu_custom_call.1} parent=74 // loop_pre_header
                  _
                $region84: #{tpu_custom_call.1} parent=74 // loop_header
                  %s325 = sphi 0, %s329
                  %p326 = scmp.ge.s32.totalorder %s325, 1
                  %s330 = sphi %s289, %s289
                  %s331 = sphi %s287, %s287
                $region85: #{tpu_custom_call.1} parent=74 // loop_header_branch
                  %328 = sbr.rel (%p326) target = $region89
                $region86: #{tpu_custom_call.1} parent=74 // loop_body
                  %v332 = vld [vmem:[%s330] sm:$0xf]
                  %333 = vst [vmem:[%s331] sm:$0xf] %v332
                  %v334 = vld [vmem:[%s330 + $0xc] sm:$0xf]
                  %335 = vst [vmem:[%s331 + $0x4] sm:$0xf] %v334
                  %v336 = vld [vmem:[%s330 + $0x18] sm:$0xf]
                  %337 = vst [vmem:[%s331 + $0x8] sm:$0xf] %v336
                  %v338 = vld [vmem:[%s330 + $0x24] sm:$0xf]
                  %339 = vst [vmem:[%s331 + $0xc] sm:$0xf] %v338
                $region87: #{tpu_custom_call.1} parent=74 // loop_footer
                  %s329 = sadd.s32 1, %s325
                $region88: #{tpu_custom_call.1} parent=74 // loop_footer_branch
                  %324 = sbr.rel target = $region84
                $region89: #{tpu_custom_call.1} parent=74 // loop_exit
                  _
              $region75: #{tpu_custom_call.1} parent=59 // pred_fallthru
                _
            $region60: #{tpu_custom_call.1} parent=55 // pred_fallthru
              _
            // Predicated region
            $region61: #{tpu_custom_call.1} parent=55 // pred_check
              _
            $region62: #{tpu_custom_call.1} parent=55 // pred_check_branch
              %295 = sbr.rel (0) target = $region64
            $region63: #{tpu_custom_call.1} parent=55 // pred_region
              loop: start=0, step=1, limit=1
              $region65: #{tpu_custom_call.1} parent=63 // loop_pre_header
                _
              $region66: #{tpu_custom_call.1} parent=63 // loop_header
                %s298 = sphi 0, %s302
                %p299 = scmp.ge.s32.totalorder %s298, 1
                %s303 = sphi %s289, %s289
                %s304 = sphi %s287, %s287
              $region67: #{tpu_custom_call.1} parent=63 // loop_header_branch
                %301 = sbr.rel (%p299) target = $region71
              $region68: #{tpu_custom_call.1} parent=63 // loop_body
                %v305 = vld [vmem:[%s303] sm:$0xf]
                %306 = vst [vmem:[%s304] sm:$0xf] %v305
                %v307 = vld [vmem:[%s303 + $0xc] sm:$0xf]
                %308 = vst [vmem:[%s304 + $0x4] sm:$0xf] %v307
                %v309 = vld [vmem:[%s303 + $0x18] sm:$0xf]
                %310 = vst [vmem:[%s304 + $0x8] sm:$0xf] %v309
                %v311 = vld [vmem:[%s303 + $0x24] sm:$0xf]
                %312 = vst [vmem:[%s304 + $0xc] sm:$0xf] %v311
              $region69: #{tpu_custom_call.1} parent=63 // loop_footer
                %s302 = sadd.s32 1, %s298
              $region70: #{tpu_custom_call.1} parent=63 // loop_footer_branch
                %297 = sbr.rel target = $region66
              $region71: #{tpu_custom_call.1} parent=63 // loop_exit
                _
            $region64: #{tpu_custom_call.1} parent=55 // pred_fallthru
              _
          $region56: #{tpu_custom_call.1} parent=51 // pred_fallthru
            _
          %340 = vnop
        $region52: #{tpu_custom_call.1} parent=47 // pred_fallthru
          _
      $region48: #{tpu_custom_call.1} parent=5 // pred_fallthru
        _
      %p341 = scmp.le.s32.totalorder 1, %s18
      %p342 = scmp.lt.s32.totalorder %s18, 4
      %p343 = pnand %p341, %p342
      %p344 = pneg %p343
      // Predicated region
      $region90: #{tpu_custom_call.1} parent=5 // pred_check
        _
      $region91: #{tpu_custom_call.1} parent=5 // pred_check_branch
        %346 = sbr.rel (%p343) target = $region93
      $region92: #{tpu_custom_call.1} parent=5 // pred_region
        %s347 = ssub.s32 %s18, 1
        %s348 = sand.u32 %s31, 1
        %s349 = sand.u32 %s31, 1
        %s350 = smul.addr %s349, 16
        %s351 = scalar_lea.vmem [#allocation2], %s350
        // Predicated region
        $region94: #{tpu_custom_call.1} parent=92 // pred_check
          %p352 = pneg %p44
        $region95: #{tpu_custom_call.1} parent=92 // pred_check_branch
          %354 = sbr.rel (%p352) target = $region97
        $region96: #{tpu_custom_call.1} parent=92 // pred_region
          _
        $region97: #{tpu_custom_call.1} parent=92 // pred_fallthru
          _
        %s355 = sand.u32 %s31, 1
        %s356 = sand.u32 %s31, 1
        %s357 = smul.addr %s356, 16
        %s358 = scalar_lea.vmem [#allocation2], %s357
        %p359 = pneg %p44
        %p360 = pneg %p41
        %p361 = pneg %p65
        %p362 = pneg %p62
        %p363 = pneg %p86
        %p364 = pneg %p83
        %p365 = pneg %p107
        %p366 = pneg %p104
        %p367 = pneg %p128
        %p368 = pneg %p125
        %p369 = pneg %p149
        %p370 = pneg %p146
        %p371 = pneg %p170
        %p372 = pneg %p167
        %p373 = pneg %p191
        %p374 = pneg %p188
        %p375 = pneg %p212
        %p376 = pneg %p209
        %p377 = pneg %p238
        %p378 = pneg %p235
        %s379 = sand.u32 %s225, 1
        %s380 = scalar_lea.sflag [#allocation4], %s379
        %s381 = sand.u32 %s225, 1
        %s382 = smul.addr %s381, 16
        %s383 = scalar_lea.vmem [#allocation3], %s382
        %v385 = vld [vmem:[%s1] sm:$0xf]
        %v386 = vld [vmem:[%s1 + $0x4] sm:$0xf]
        %v387 = vld [vmem:[%s2] sm:$0xff]
        %v388 = vld [vmem:[%s2 + $0x8] sm:$0xff]
        %v389 = vld [vmem:[%s3] sm:$0xf]
        %v390 = vld [vmem:[%s4] sm:$0xff]
        %v391 = vld [vmem:[%s5] sm:$0xf]
        %v392 = vld [vmem:[%s5 + $0x4] sm:$0xf]
        %v393 = vld [vmem:[%s6] sm:$0xff]
        %v394 = vld [vmem:[%s6 + $0x8] sm:$0xff]
        %v395 = vld [vmem:[%s7] sm:$0xf]
        %v396 = vld [vmem:[%s7 + $0x4] sm:$0xf]
        %v397 = vld [vmem:[%s7 + $0x8] sm:$0xf]
        %v398 = vld [vmem:[%s7 + $0xc] sm:$0xf]
        %v399 = vld [vmem:[%s8] sm:$0xff]
        %v400 = vld [vmem:[%s8 + $0x8] sm:$0xff]
        %v401 = vld [vmem:[%s8 + $0x10] sm:$0xff]
        %v402 = vld [vmem:[%s8 + $0x18] sm:$0xff]
        %v403 = vld [vmem:[%s351] sm:$0xf]
        %v404 = vld [vmem:[%s351 + $0x4] sm:$0xf]
        %v405 = vld [vmem:[%s351 + $0x8] sm:$0xf]
        %v406 = vld [vmem:[%s351 + $0xc] sm:$0xf]
        %408 = vset.pattern.permute.xlu0 0
        %409 = vperm.xlu0 %408, %v387
        %v410 = vpop.permute.xlu0 %409
        %413 = vset.pattern.permute.xlu0 0
        %414 = vperm.xlu0 %413, %v388
        %v415 = vpop.permute.xlu0 %414
        %v419 = vunpack.c.l.b16 %v385
        %v420 = vunpack.c.l.b16 %v386
        %v421 = vpack.c.b16 %v420, %v419
        %v426 = vunpack.c.l.b16 %v403
        %v427 = vunpack.c.l.b16 %v404
        %v428 = vunpack.c.l.b16 %v405
        %v429 = vunpack.c.l.b16 %v406
        %v430 = vpack.c.b16 %v427, %v426
        %v431 = vpack.c.b16 %v429, %v428
        %vm434 = vcmask 261120
        %v436 = vsel %vm434, %v421, 0
        %438 = vmatprep.subr.bf16.mxu0 0
        %439 = vmatpush1.bf16.msra.mxu0 %v430
        %440 = vmatprep.subr.bf16.mxu0 0
        %441 = vmatpush1.bf16.msra.mxu0 %v431
        %442 = vmatprep.subr.bf16.mxu0 0
        %443 = vmatpush1.bf16.msra.mxu0 0
        %444 = vmatprep.subr.bf16.mxu0 0
        %445 = vmatpush1.bf16.msra.mxu0 0
        %446 = vmatprep.subr.bf16.mxu0 0
        %447 = vmatpush1.bf16.msra.mxu0 0
        %448 = vmatprep.subr.bf16.mxu0 0
        %449 = vmatpush1.bf16.msra.mxu0 0
        %450 = vmatprep.subr.bf16.mxu0 0
        %451 = vmatpush1.bf16.msra.mxu0 0
        %452 = vmatprep.subr.bf16.mxu0 0
        %453 = vmatpush1.bf16.msra.mxu0 0
        %454 = vmatprep.subr.bf16.mxu0 0
        %455 = vmatpush1.bf16.msra.mxu0 0
        %456 = vmatprep.subr.bf16.mxu0 0
        %457 = vmatpush1.bf16.msra.mxu0 0
        %458 = vmatprep.subr.bf16.mxu0 0
        %459 = vmatpush1.bf16.msra.mxu0 0
        %460 = vmatprep.subr.bf16.mxu0 0
        %461 = vmatpush1.bf16.msra.mxu0 0
        %462 = vmatprep.subr.bf16.mxu0 0
        %463 = vmatpush1.bf16.msra.mxu0 0
        %464 = vmatprep.subr.bf16.mxu0 0
        %465 = vmatpush1.bf16.msra.mxu0 0
        %466 = vmatprep.subr.bf16.mxu0 0
        %467 = vmatpush1.bf16.msra.mxu0 0
        %468 = vmatprep.subr.bf16.mxu0 0
        %469 = vmatpush1.bf16.msra.mxu0 0
        %470 = vmatprep.mubr.bf16.mxu0 0
        %471 = vmatmul.mubr.bf16.gmra.mrb[0].mxu0 %v436
        %v472 = vpop.f32.mrb[0].mxu0
        %v473 = vadd.f32 %v410, %v472
        %v474 = vpop.f32.mrb[0].mxu0
        %v475 = vpop.f32.mrb[0].mxu0
        %v476 = vadd.f32 %v415, %v475
        %v477 = vpop.f32.mrb[0].mxu0
        %478 = vdwg.mxu0
        %v479 = vsub.f32 0.0, %v473
        %v480 = vsub.f32 0.0, %v476
        %v481 = vmul.f32 %v479, 1.442695
        %v482 = vpow.pop %v481
        %v483 = vmul.f32 %v480, 1.442695
        %v484 = vpow.pop %v483
        %v485 = vadd.f32 %v482, 1.0
        %v486 = vadd.f32 %v484, 1.0
        %v487 = vrcp.pop %v485
        %v488 = vrcp.pop %v486
        %v489 = vpack.c.bf16 %v488, %v487
        %491 = vset.pattern.permute.xlu0 0
        %492 = vperm.xlu0 %491, %v390
        %v493 = vpop.permute.xlu0 %492
        %vm495 = vcmask 130048
        %v497 = vsel %vm495, %v389, 0
        %499 = vmatprep.subr.bf16.mxu0 0
        %500 = vmatpush1.bf16.msra.mxu0 %v489
        %501 = vmatprep.subr.bf16.mxu0 0
        %502 = vmatpush1.bf16.msra.mxu0 0
        %503 = vmatprep.subr.bf16.mxu0 0
        %504 = vmatpush1.bf16.msra.mxu0 0
        %505 = vmatprep.subr.bf16.mxu0 0
        %506 = vmatpush1.bf16.msra.mxu0 0
        %507 = vmatprep.subr.bf16.mxu0 0
        %508 = vmatpush1.bf16.msra.mxu0 0
        %509 = vmatprep.subr.bf16.mxu0 0
        %510 = vmatpush1.bf16.msra.mxu0 0
        %511 = vmatprep.subr.bf16.mxu0 0
        %512 = vmatpush1.bf16.msra.mxu0 0
        %513 = vmatprep.subr.bf16.mxu0 0
        %514 = vmatpush1.bf16.msra.mxu0 0
        %515 = vmatprep.subr.bf16.mxu0 0
        %516 = vmatpush1.bf16.msra.mxu0 0
        %517 = vmatprep.subr.bf16.mxu0 0
        %518 = vmatpush1.bf16.msra.mxu0 0
        %519 = vmatprep.subr.bf16.mxu0 0
        %520 = vmatpush1.bf16.msra.mxu0 0
        %521 = vmatprep.subr.bf16.mxu0 0
        %522 = vmatpush1.bf16.msra.mxu0 0
        %523 = vmatprep.subr.bf16.mxu0 0
        %524 = vmatpush1.bf16.msra.mxu0 0
        %525 = vmatprep.subr.bf16.mxu0 0
        %526 = vmatpush1.bf16.msra.mxu0 0
        %527 = vmatprep.subr.bf16.mxu0 0
        %528 = vmatpush1.bf16.msra.mxu0 0
        %529 = vmatprep.subr.bf16.mxu0 0
        %530 = vmatpush1.bf16.msra.mxu0 0
        %531 = vmatprep.mubr.bf16.mxu0 0
        %532 = vmatmul.mubr.bf16.gmra.mrb[0].mxu0 %v497
        %v533 = vpop.f32.mrb[0].mxu0
        %v534 = vadd.f32 %v493, %v533
        %v535 = vpop.f32.mrb[0].mxu0
        %v536 = vpop.f32.mrb[0].mxu0
        %v537 = vpop.f32.mrb[0].mxu0
        %538 = vdwg.mxu0
        %v539 = vsub.f32 0.0, %v534
        %v540 = vmul.f32 %v539, 1.442695
        %v541 = vpow.pop %v540
        %v542 = vadd.f32 %v541, 1.0
        %v543 = vrcp.pop %v542
        %v544 = vpack.c.bf16 %v543, %v543
        %546 = vset.pattern.permute.xlu0 0
        %547 = vperm.xlu0 %546, %v393
        %v548 = vpop.permute.xlu0 %547
        %551 = vset.pattern.permute.xlu0 0
        %552 = vperm.xlu0 %551, %v394
        %v553 = vpop.permute.xlu0 %552
        %v557 = vunpack.c.l.b16 %v391
        %v558 = vunpack.c.l.b16 %v392
        %v559 = vpack.c.b16 %v558, %v557
        %vm560 = vcmask 64512
        %v562 = vsel %vm560, %v559, 0
        %vm564 = vcmask 1043456
        %v566 = vsel %vm564, %v544, 0
        %568 = vmatprep.subr.bf16.mxu0 0
        %569 = vmatpush1.bf16.msra.mxu0 %v566
        %570 = vmatprep.subr.bf16.mxu0 0
        %571 = vmatpush1.bf16.msra.mxu0 0
        %572 = vmatprep.subr.bf16.mxu0 0
        %573 = vmatpush1.bf16.msra.mxu0 0
        %574 = vmatprep.subr.bf16.mxu0 0
        %575 = vmatpush1.bf16.msra.mxu0 0
        %576 = vmatprep.subr.bf16.mxu0 0
        %577 = vmatpush1.bf16.msra.mxu0 0
        %578 = vmatprep.subr.bf16.mxu0 0
        %579 = vmatpush1.bf16.msra.mxu0 0
        %580 = vmatprep.subr.bf16.mxu0 0
        %581 = vmatpush1.bf16.msra.mxu0 0
        %582 = vmatprep.subr.bf16.mxu0 0
        %583 = vmatpush1.bf16.msra.mxu0 0
        %584 = vmatprep.subr.bf16.mxu0 0
        %585 = vmatpush1.bf16.msra.mxu0 0
        %586 = vmatprep.subr.bf16.mxu0 0
        %587 = vmatpush1.bf16.msra.mxu0 0
        %588 = vmatprep.subr.bf16.mxu0 0
        %589 = vmatpush1.bf16.msra.mxu0 0
        %590 = vmatprep.subr.bf16.mxu0 0
        %591 = vmatpush1.bf16.msra.mxu0 0
        %592 = vmatprep.subr.bf16.mxu0 0
        %593 = vmatpush1.bf16.msra.mxu0 0
        %594 = vmatprep.subr.bf16.mxu0 0
        %595 = vmatpush1.bf16.msra.mxu0 0
        %596 = vmatprep.subr.bf16.mxu0 0
        %597 = vmatpush1.bf16.msra.mxu0 0
        %598 = vmatprep.subr.bf16.mxu0 0
        %599 = vmatpush1.bf16.msra.mxu0 0
        %600 = vmatprep.mubr.bf16.mxu0 0
        %601 = vmatmul.mubr.bf16.gmra.mrb[0].mxu0 %v562
        %v602 = vpop.f32.mrb[0].mxu0
        %v603 = vadd.f32 %v548, %v602
        %v604 = vpop.f32.mrb[0].mxu0
        %v605 = vpop.f32.mrb[0].mxu0
        %v606 = vadd.f32 %v553, %v605
        %v607 = vpop.f32.mrb[0].mxu0
        %608 = vdwg.mxu0
        %v609 = vsub.f32 0.0, %v603
        %v610 = vsub.f32 0.0, %v606
        %v611 = vmul.f32 %v609, 1.442695
        %v612 = vpow.pop %v611
        %v613 = vmul.f32 %v610, 1.442695
        %v614 = vpow.pop %v613
        %v615 = vadd.f32 %v612, 1.0
        %v616 = vadd.f32 %v614, 1.0
        %v617 = vrcp.pop %v615
        %v618 = vrcp.pop %v616
        %v619 = vpack.c.bf16 %v618, %v617
        %621 = vset.pattern.permute.xlu0 0
        %622 = vperm.xlu0 %621, %v399
        %v623 = vpop.permute.xlu0 %622
        %626 = vset.pattern.permute.xlu0 0
        %627 = vperm.xlu0 %626, %v400
        %v628 = vpop.permute.xlu0 %627
        %631 = vset.pattern.permute.xlu0 0
        %632 = vperm.xlu0 %631, %v401
        %v633 = vpop.permute.xlu0 %632
        %636 = vset.pattern.permute.xlu0 0
        %637 = vperm.xlu0 %636, %v402
        %v638 = vpop.permute.xlu0 %637
        %v644 = vunpack.c.l.b16 %v395
        %v645 = vunpack.c.l.b16 %v396
        %v646 = vunpack.c.l.b16 %v397
        %v647 = vunpack.c.l.b16 %v398
        %v648 = vpack.c.b16 %v645, %v644
        %v649 = vpack.c.b16 %v647, %v646
        %v651 = vsel %vm495, %v648, 0
        %v654 = vsel %vm495, %v649, 0
        %656 = vmatprep.subr.bf16.mxu0 0
        %657 = vmatpush1.bf16.msra.mxu0 %v619
        %658 = vmatprep.subr.bf16.mxu0 0
        %659 = vmatpush1.bf16.msra.mxu0 0
        %660 = vmatprep.subr.bf16.mxu0 0
        %661 = vmatpush1.bf16.msra.mxu0 0
        %662 = vmatprep.subr.bf16.mxu0 0
        %663 = vmatpush1.bf16.msra.mxu0 0
        %664 = vmatprep.subr.bf16.mxu0 0
        %665 = vmatpush1.bf16.msra.mxu0 0
        %666 = vmatprep.subr.bf16.mxu0 0
        %667 = vmatpush1.bf16.msra.mxu0 0
        %668 = vmatprep.subr.bf16.mxu0 0
        %669 = vmatpush1.bf16.msra.mxu0 0
        %670 = vmatprep.subr.bf16.mxu0 0
        %671 = vmatpush1.bf16.msra.mxu0 0
        %672 = vmatprep.subr.bf16.mxu0 0
        %673 = vmatpush1.bf16.msra.mxu0 0
        %674 = vmatprep.subr.bf16.mxu0 0
        %675 = vmatpush1.bf16.msra.mxu0 0
        %676 = vmatprep.subr.bf16.mxu0 0
        %677 = vmatpush1.bf16.msra.mxu0 0
        %678 = vmatprep.subr.bf16.mxu0 0
        %679 = vmatpush1.bf16.msra.mxu0 0
        %680 = vmatprep.subr.bf16.mxu0 0
        %681 = vmatpush1.bf16.msra.mxu0 0
        %682 = vmatprep.subr.bf16.mxu0 0
        %683 = vmatpush1.bf16.msra.mxu0 0
        %684 = vmatprep.subr.bf16.mxu0 0
        %685 = vmatpush1.bf16.msra.mxu0 0
        %686 = vmatprep.subr.bf16.mxu0 0
        %687 = vmatpush1.bf16.msra.mxu0 0
        %688 = vmatprep.mubr.bf16.mxu0 0
        %689 = vmatmul.mubr.bf16.gmra.mrb[0].mxu0 %v651
        %v690 = vpop.f32.mrb[0].mxu0
        %v691 = vadd.f32 %v623, %v690
        %v692 = vpop.f32.mrb[0].mxu0
        %v693 = vpop.f32.mrb[0].mxu0
        %v694 = vadd.f32 %v628, %v693
        %v695 = vpop.f32.mrb[0].mxu0
        %696 = vmatprep.mubr.bf16.mxu0 0
        %697 = vmatmul.mubr.bf16.gmra.mrb[0].mxu0 %v654
        %v698 = vpop.f32.mrb[0].mxu0
        %v699 = vadd.f32 %v633, %v698
        %v700 = vpop.f32.mrb[0].mxu0
        %v701 = vpop.f32.mrb[0].mxu0
        %v702 = vadd.f32 %v638, %v701
        %v703 = vpop.f32.mrb[0].mxu0
        %704 = vdwg.mxu0
        %v705 = vsub.f32 0.0, %v691
        %v706 = vsub.f32 0.0, %v694
        %v707 = vsub.f32 0.0, %v699
        %v708 = vsub.f32 0.0, %v702
        %v709 = vmul.f32 %v705, 1.442695
        %v710 = vpow.pop %v709
        %v711 = vmul.f32 %v706, 1.442695
        %v712 = vpow.pop %v711
        %v713 = vmul.f32 %v707, 1.442695
        %v714 = vpow.pop %v713
        %v715 = vmul.f32 %v708, 1.442695
        %v716 = vpow.pop %v715
        %v717 = vadd.f32 %v710, 1.0
        %v718 = vadd.f32 %v712, 1.0
        %v719 = vadd.f32 %v714, 1.0
        %v720 = vadd.f32 %v716, 1.0
        %v721 = vrcp.pop %v717
        %v722 = vrcp.pop %v718
        %v723 = vrcp.pop %v719
        %v724 = vrcp.pop %v720
        %v725 = vpack.c.bf16 %v722, %v721
        %v726 = vpack.c.bf16 %v724, %v723
        %v729 = vunpack.c.l.b16 %v725
        %v730 = vunpack.c.h.b16 %v725
        %v731 = vunpack.c.l.b16 %v726
        %v732 = vunpack.c.h.b16 %v726
        %v733 = vpack.c.b16 %v729, %v729
        %v734 = vpack.c.b16 %v730, %v730
        %v735 = vpack.c.b16 %v731, %v731
        %v736 = vpack.c.b16 %v732, %v732
        %741 = vst [vmem:[%s383] sm:$0xf] %v733
        %742 = vst [vmem:[%s383 + $0x4] sm:$0xf] %v734
        %743 = vst [vmem:[%s383 + $0x8] sm:$0xf] %v735
        %744 = vst [vmem:[%s383 + $0xc] sm:$0xf] %v736
        %s745 = sand.u32 %s225, 1
        %s746 = scalar_lea.sflag [#allocation4], %s745
        %s747 = sand.u32 %s225, 1
        %s748 = smul.addr %s747, 16
        %s749 = scalar_lea.vmem [#allocation3], %s748
        // Predicated region
        $region98: #{tpu_custom_call.1} parent=92 // pred_check
          %p750 = pneg %p235
        $region99: #{tpu_custom_call.1} parent=92 // pred_check_branch
          %752 = sbr.rel (%p750) target = $region101
        $region100: #{tpu_custom_call.1} parent=92 // pred_region
          %s754 = ssub.s32 256, 256
          %755 = vsyncadd %s746, %s754
          %s756 = smul.addr %s23, 64
          %s757 = scalar_lea.hbm %s9, %s756
          %s758 = sshll.u32 %s749, 4
          %s759 = int_to_ptr.vmem [resolvable:$true] %s758
          %764 = dma.vmem_to_hbm [thread:$0]  %s759, 256, %s757, %s746, 64, 192, 4
        $region101: #{tpu_custom_call.1} parent=92 // pred_fallthru
          _
      $region93: #{tpu_custom_call.1} parent=5 // pred_fallthru
        _
      %p765 = scmp.le.s32.totalorder 2, %s18
      // Predicated region
      $region102: #{tpu_custom_call.1} parent=5 // pred_check
        %p766 = pneg %p765
      $region103: #{tpu_custom_call.1} parent=5 // pred_check_branch
        %768 = sbr.rel (%p766) target = $region105
      $region104: #{tpu_custom_call.1} parent=5 // pred_region
        %s769 = ssub.s32 %s18, 2
        // Predicated region
        $region106: #{tpu_custom_call.1} parent=104 // pred_check
          %p770 = pneg %p241
        $region107: #{tpu_custom_call.1} parent=104 // pred_check_branch
          %772 = sbr.rel (%p770) target = $region109
        $region108: #{tpu_custom_call.1} parent=104 // pred_region
          %s773 = sand.u32 %s226, 1
          %s774 = scalar_lea.sflag [#allocation4], %s773
          %s775 = sand.u32 %s226, 1
          %s776 = smul.addr %s775, 16
          %s777 = scalar_lea.vmem [#allocation3], %s776
          %778 = dma.done %s774, 256
        $region109: #{tpu_custom_call.1} parent=104 // pred_fallthru
          _
      $region105: #{tpu_custom_call.1} parent=5 // pred_fallthru
        _
    $region6: #{tpu_custom_call.1} parent=1 // loop_footer
      %s22 = sadd.s32 1, %s18
    $region7: #{tpu_custom_call.1} parent=1 // loop_footer_branch
      %17 = sbr.rel target = $region3
    $region8: #{tpu_custom_call.1} parent=1 // loop_exit
      _
    %779 = vsyncpa [#allocation4], 1
    %s780 = scalar_lea.sflag [#allocation4], 1
    %781 = vsyncpa %s780, 1

</llo_original>
